<compile_context>
chip_gen: v5e
topology: v5e:2x2
jax: 0.10.0
libtpu: 0.0.40
codegen_flags: <defaults>
</compile_context>

<pallas_src>
import math
import jax
import jax.numpy as jnp
from jax.experimental import pallas as pl
from jax.experimental.pallas import tpu as pltpu

# ----------------------------- config ---------------------------------------
BATCH      = 2
SEQ        = 8
D_MODEL    = 32
NUM_HEADS  = 4
D_FF       = 64
ENCODER_NO = 2
LN_EPS     = 1e-5
D_HEAD     = D_MODEL // NUM_HEADS

# Rows of the packed per-layer "vector slab" (shape (8, 128)):
#   0: bqkv (3*D)   1: bo (D)     2: ln1_g (D)  3: ln1_b (D)
#   4: b1 (D_FF)    5: b2 (D)     6: ln2_g (D)  7: ln2_b (D)
_VEC_ROWS  = 8
_VEC_LANES = 128


# ----------------------------- kernel ---------------------------------------
def encoder_stack_kernel(x_ref, wqkv_ref, wo_ref, w1_ref, w2_ref, vec_ref,
                         o_ref, x_res):
    B, S, D = x_ref.shape
    BS = B * S
    H  = NUM_HEADS
    Dh = D // H
    layer = pl.program_id(0)

    # Load the input activation once (layer 0); keep it resident in VMEM scratch.
    @pl.when(layer == 0)
    def _load_x():
        x_res[...] = x_ref[...].reshape(BS, D).astype(jnp.float32)

    x = x_res[...]                                     # (B*S, D) float32

    # Per-layer parameters (leading layer axis already selected by BlockSpec).
    wqkv = wqkv_ref[0]                                 # (D, 3D)
    wo   = wo_ref[0]                                   # (D, D)
    w1   = w1_ref[0]                                   # (D, D_FF)
    w2   = w2_ref[0]                                   # (D_FF, D)
    vec  = vec_ref[0]                                  # (8, 128) packed vectors

    bqkv  = vec[0:1, 0:3 * D]                          # (1, 3D)
    bo    = vec[1:2, 0:D]
    ln1_g = vec[2:3, 0:D]
    ln1_b = vec[3:4, 0:D]
    b1    = vec[4:5, 0:D_FF]
    b2    = vec[5:6, 0:D]
    ln2_g = vec[6:7, 0:D]
    ln2_b = vec[7:8, 0:D]

    def layer_norm(h, g, b):
        mu  = jnp.mean(h, axis=-1, keepdims=True)
        var = jnp.mean((h - mu) ** 2, axis=-1, keepdims=True)
        return (h - mu) * jax.lax.rsqrt(var + LN_EPS) * g + b

    # ---- fused QKV projection: one (BS,D)x(D,3D) matmul ----
    qkv = jnp.dot(x, wqkv, preferred_element_type=jnp.float32) + bqkv   # (BS, 3D)
    scale = 1.0 / math.sqrt(Dh)

    # ---- multi-head self attention (batched over B per head; no concat: each
    #      head's output is folded through its Wo row-slice and accumulated) ----
    attn = None
    for h in range(H):                                 # static, H = 4
        qh = qkv[:,          h * Dh:(h + 1) * Dh].reshape(B, S, Dh)
        kh = qkv[:,     D +  h * Dh:     D + (h + 1) * Dh].reshape(B, S, Dh)
        vh = qkv[:, 2 * D +  h * Dh: 2 * D + (h + 1) * Dh].reshape(B, S, Dh)

        s = jnp.einsum("bqd,bkd->bqk", qh, kh,
                       preferred_element_type=jnp.float32) * scale      # (B,S,S)
        s = s - jnp.max(s, axis=-1, keepdims=True)
        p = jnp.exp(s)
        p = p * pl.reciprocal(jnp.sum(p, axis=-1, keepdims=True), approx=True)

        oh = jnp.einsum("bqk,bkd->bqd", p, vh,
                        preferred_element_type=jnp.float32).reshape(BS, Dh)
        contrib = jnp.dot(oh, wo[h * Dh:(h + 1) * Dh, :],
                          preferred_element_type=jnp.float32)            # (BS, D)
        attn = contrib if attn is None else attn + contrib
    attn = attn + bo

    # ---- residual + layernorm 1 ----
    h1 = layer_norm(x + attn, ln1_g, ln1_b)

    # ---- feed-forward ----
    f = jnp.maximum(jnp.dot(h1, w1, preferred_element_type=jnp.float32) + b1, 0.0)
    f = jnp.dot(f, w2, preferred_element_type=jnp.float32) + b2

    # ---- residual + layernorm 2 ----
    y = layer_norm(h1 + f, ln2_g, ln2_b)

    # Carry to next layer (stays in VMEM).
    x_res[...] = y

    # Only write the final layer's result back out.
    @pl.when(layer == pl.num_programs(0) - 1)
    def _store_out():
        o_ref[...] = y.reshape(B, S, D).astype(o_ref.dtype)


# ----------------------------- wrapper ---------------------------------------
def encoder_pallas(x, stacked):
    """Apply the full encoder stack in a single pallas_call."""
    B, S, D = x.shape
    L = stacked["wqkv"].shape[0]

    grid_spec = pltpu.PrefetchScalarGridSpec(
        num_scalar_prefetch=0,
        grid=(L,),
        in_specs=[
            pl.BlockSpec((B, S, D),          lambda l: (0, 0, 0)),   # x (read once)
            pl.BlockSpec((1, D, 3 * D),      lambda l: (l, 0, 0)),   # wqkv
            pl.BlockSpec((1, D, D),          lambda l: (l, 0, 0)),   # wo
            pl.BlockSpec((1, D, D_FF),       lambda l: (l, 0, 0)),   # w1
            pl.BlockSpec((1, D_FF, D),       lambda l: (l, 0, 0)),   # w2
            pl.BlockSpec((1, _VEC_ROWS, _VEC_LANES), lambda l: (l, 0, 0)),  # vec slab
        ],
        out_specs=pl.BlockSpec((B, S, D), lambda l: (0, 0, 0)),      # resident output
        scratch_shapes=[pltpu.VMEM((B * S, D), jnp.float32)],        # resident activation
    )

    return pl.pallas_call(
        encoder_stack_kernel,
        out_shape=jax.ShapeDtypeStruct((B, S, D), x.dtype),
        grid_spec=grid_spec,
        compiler_params=pltpu.CompilerParams(
            dimension_semantics=("arbitrary",)),   # layers are sequential
    )(x, stacked["wqkv"], stacked["wo"], stacked["w1"], stacked["w2"],
      stacked["vec"])


# ----------------------------- parameter init / packing ----------------------
def init_block_params(key, d_model, d_ff):
    ks = jax.random.split(key, 8)
    std = 0.05
    return {
        "wq": jax.random.normal(ks[0], (d_model, d_model), jnp.float32) * std,
        "bq": jnp.zeros((d_model,), jnp.float32),
        "wk": jax.random.normal(ks[1], (d_model, d_model), jnp.float32) * std,
        "bk": jnp.zeros((d_model,), jnp.float32),
        "wv": jax.random.normal(ks[2], (d_model, d_model), jnp.float32) * std,
        "bv": jnp.zeros((d_model,), jnp.float32),
        "wo": jax.random.normal(ks[3], (d_model, d_model), jnp.float32) * std,
        "bo": jax.random.normal(ks[4], (d_model,), jnp.float32) * std,
        "ln1_g": jnp.ones((d_model,), jnp.float32),
        "ln1_b": jnp.zeros((d_model,), jnp.float32),
        "w1": jax.random.normal(ks[5], (d_model, d_ff), jnp.float32) * std,
        "b1": jax.random.normal(ks[6], (d_ff,), jnp.float32) * std,
        "w2": jax.random.normal(ks[7], (d_ff, d_model), jnp.float32) * std,
        "b2": jnp.zeros((d_model,), jnp.float32),
        "ln2_g": jnp.ones((d_model,), jnp.float32),
        "ln2_b": jnp.zeros((d_model,), jnp.float32),
    }


def stack_params(all_params):
    """Stack per-layer params with a leading layer axis + pack small vectors."""
    def pad_row(v):
        v = v.reshape(-1)
        return jnp.pad(v, (0, _VEC_LANES - v.shape[0]))

    wqkv, wo, w1, w2, vec = [], [], [], [], []
    for p in all_params:
        wqkv.append(jnp.concatenate([p["wq"], p["wk"], p["wv"]], axis=1))  # (D, 3D)
        wo.append(p["wo"])
        w1.append(p["w1"])
        w2.append(p["w2"])
        bqkv = jnp.concatenate([p["bq"], p["bk"], p["bv"]])
        vec.append(jnp.stack([
            pad_row(bqkv), pad_row(p["bo"]), pad_row(p["ln1_g"]), pad_row(p["ln1_b"]),
            pad_row(p["b1"]), pad_row(p["b2"]), pad_row(p["ln2_g"]), pad_row(p["ln2_b"]),
        ]))
    return {
        "wqkv": jnp.stack(wqkv),   # (L, D, 3D)
        "wo":   jnp.stack(wo),     # (L, D, D)
        "w1":   jnp.stack(w1),     # (L, D, D_FF)
        "w2":   jnp.stack(w2),     # (L, D_FF, D)
        "vec":  jnp.stack(vec),    # (L, 8, 128)
    }


# ----------------------------- pure-JAX reference -----------------------------
def encoder_block_ref(x, p):
    def ln(h, g, b):
        mu = jnp.mean(h, axis=-1, keepdims=True)
        var = jnp.mean((h - mu) ** 2, axis=-1, keepdims=True)
        return (h - mu) * jax.lax.rsqrt(var + LN_EPS) * g + b

    B, S, D = x.shape
    H, Dh = NUM_HEADS, D // NUM_HEADS
    q = x @ p["wq"] + p["bq"]
    k = x @ p["wk"] + p["bk"]
    v = x @ p["wv"] + p["bv"]
    q = q.reshape(B, S, H, Dh).transpose(0, 2, 1, 3)
    k = k.reshape(B, S, H, Dh).transpose(0, 2, 1, 3)
    v = v.reshape(B, S, H, Dh).transpose(0, 2, 1, 3)
    s = jnp.einsum("bhqd,bhkd->bhqk", q, k) / math.sqrt(Dh)
    a = jax.nn.softmax(s, axis=-1)
    o = jnp.einsum("bhqk,bhkd->bhqd", a, v).transpose(0, 2, 1, 3).reshape(B, S, D)
    o = o @ p["wo"] + p["bo"]
    h1 = ln(x + o, p["ln1_g"], p["ln1_b"])
    f = jnp.maximum(h1 @ p["w1"] + p["b1"], 0.0) @ p["w2"] + p["b2"]
    return ln(h1 + f, p["ln2_g"], p["ln2_b"])


def encoder_ref(x, all_params):
    for p in all_params:
        x = encoder_block_ref(x, p)
    return x


# ----------------------------- main -------------------------------------------
if __name__ == "__main__":
    key = jax.random.PRNGKey(0)
    k_x, k_p = jax.random.split(key)

    x = jax.random.normal(k_x, (BATCH, SEQ, D_MODEL), jnp.float32)

    block_keys = jax.random.split(k_p, ENCODER_NO)
    all_params = [init_block_params(bk, D_MODEL, D_FF) for bk in block_keys]
    stacked = stack_params(all_params)

    out = encoder_pallas(x, stacked)
    out = jax.block_until_ready(out)

    ref = encoder_ref(x, all_params)
    assert out.shape == (BATCH, SEQ, D_MODEL)
    # Slightly looser tolerance: softmax denom uses the approximate EUP reciprocal.
    assert jnp.allclose(out, ref, rtol=5e-3, atol=5e-3), "mismatch vs pure-JAX reference"

    print("KERNEL_OK")
</pallas_src>

<mosaic_0001>
module attributes {stable_mosaic.version = 11 : i64} {
  func.func @encoder_stack_kernel(%arg0: i32, %arg1: memref<2x8x32xf32, #tpu.memory_space<vmem>>, %arg2: memref<1x32x96xf32, #tpu.memory_space<vmem>>, %arg3: memref<1x32x32xf32, #tpu.memory_space<vmem>>, %arg4: memref<1x32x64xf32, #tpu.memory_space<vmem>>, %arg5: memref<1x64x32xf32, #tpu.memory_space<vmem>>, %arg6: memref<1x8x128xf32, #tpu.memory_space<vmem>>, %arg7: memref<2x8x32xf32, #tpu.memory_space<vmem>>, %arg8: memref<16x32xf32, #tpu.memory_space<vmem>>) attributes {dimension_semantics = [#tpu.dimension_semantics<arbitrary>], iteration_bounds = array<i64: 2>, scalar_prefetch = 0 : i64, scratch_operands = 1 : i64, tpu.core_type = #tpu.core_type<tc>, window_params = [{pipeline_mode = #tpu.pipeline_mode<synchronous>, transform_indices = @transform_0, window_bounds = array<i64: 2, 8, 32>}, {transform_indices = @transform_1, window_bounds = array<i64: 1, 32, 96>}, {transform_indices = @transform_2, window_bounds = array<i64: 1, 32, 32>}, {transform_indices = @transform_3, window_bounds = array<i64: 1, 32, 64>}, {transform_indices = @transform_4, window_bounds = array<i64: 1, 64, 32>}, {transform_indices = @transform_5, window_bounds = array<i64: 1, 8, 128>}, {pipeline_mode = #tpu.pipeline_mode<synchronous>, transform_indices = @transform_6, window_bounds = array<i64: 2, 8, 32>}]} {
    %c0_i32 = arith.constant 0 : i32
    %0 = arith.cmpi eq, %arg0, %c0_i32 : i32
    %1 = arith.extui %0 : i1 to i32
    %c0_i32_0 = arith.constant 0 : i32
    %2 = arith.cmpi ne, %1, %c0_i32_0 : i32
    scf.if %2 {
      %c0_57 = arith.constant 0 : index
      %c0_58 = arith.constant 0 : index
      %c0_59 = arith.constant 0 : index
      %180 = vector.load %arg1[%c0_57, %c0_58, %c0_59] : memref<2x8x32xf32, #tpu.memory_space<vmem>>, vector<2x8x32xf32>
      %181 = vector.shape_cast %180 : vector<2x8x32xf32> to vector<16x32xf32>
      %c0_60 = arith.constant 0 : index
      %c0_61 = arith.constant 0 : index
      %182 = vector.load %arg8[%c0_60, %c0_61] : memref<16x32xf32, #tpu.memory_space<vmem>>, vector<16x32xf32>
      tpu.vector_store %arg8[%c0_60, %c0_61], %181 {strides = array<i32>} : memref<16x32xf32, #tpu.memory_space<vmem>>, vector<16x32xf32>,
    } else {
    }
    %c0 = arith.constant 0 : index
    %c0_1 = arith.constant 0 : index
    %3 = vector.load %arg8[%c0, %c0_1] : memref<16x32xf32, #tpu.memory_space<vmem>>, vector<16x32xf32>
    %c0_2 = arith.constant 0 : index
    %c0_3 = arith.constant 0 : index
    %c0_4 = arith.constant 0 : index
    %4 = vector.load %arg2[%c0_2, %c0_3, %c0_4] : memref<1x32x96xf32, #tpu.memory_space<vmem>>, vector<1x32x96xf32>
    %5 = vector.shape_cast %4 : vector<1x32x96xf32> to vector<32x96xf32>
    %c0_5 = arith.constant 0 : index
    %c0_6 = arith.constant 0 : index
    %c0_7 = arith.constant 0 : index
    %6 = vector.load %arg3[%c0_5, %c0_6, %c0_7] : memref<1x32x32xf32, #tpu.memory_space<vmem>>, vector<1x32x32xf32>
    %7 = vector.shape_cast %6 : vector<1x32x32xf32> to vector<32x32xf32>
    %c0_8 = arith.constant 0 : index
    %c0_9 = arith.constant 0 : index
    %c0_10 = arith.constant 0 : index
    %8 = vector.load %arg4[%c0_8, %c0_9, %c0_10] : memref<1x32x64xf32, #tpu.memory_space<vmem>>, vector<1x32x64xf32>
    %9 = vector.shape_cast %8 : vector<1x32x64xf32> to vector<32x64xf32>
    %c0_11 = arith.constant 0 : index
    %c0_12 = arith.constant 0 : index
    %c0_13 = arith.constant 0 : index
    %10 = vector.load %arg5[%c0_11, %c0_12, %c0_13] : memref<1x64x32xf32, #tpu.memory_space<vmem>>, vector<1x64x32xf32>
    %11 = vector.shape_cast %10 : vector<1x64x32xf32> to vector<64x32xf32>
    %c0_14 = arith.constant 0 : index
    %c0_15 = arith.constant 0 : index
    %c0_16 = arith.constant 0 : index
    %12 = vector.load %arg6[%c0_14, %c0_15, %c0_16] : memref<1x8x128xf32, #tpu.memory_space<vmem>>, vector<1x8x128xf32>
    %13 = vector.shape_cast %12 : vector<1x8x128xf32> to vector<8x128xf32>
    %14 = vector.extract_strided_slice %13 {offsets = [0, 0], sizes = [1, 96], strides = [1, 1]} : vector<8x128xf32> to vector<1x96xf32>
    %15 = vector.extract_strided_slice %13 {offsets = [1, 0], sizes = [1, 32], strides = [1, 1]} : vector<8x128xf32> to vector<1x32xf32>
    %16 = vector.extract_strided_slice %13 {offsets = [2, 0], sizes = [1, 32], strides = [1, 1]} : vector<8x128xf32> to vector<1x32xf32>
    %17 = vector.extract_strided_slice %13 {offsets = [3, 0], sizes = [1, 32], strides = [1, 1]} : vector<8x128xf32> to vector<1x32xf32>
    %18 = vector.extract_strided_slice %13 {offsets = [4, 0], sizes = [1, 64], strides = [1, 1]} : vector<8x128xf32> to vector<1x64xf32>
    %19 = vector.extract_strided_slice %13 {offsets = [5, 0], sizes = [1, 32], strides = [1, 1]} : vector<8x128xf32> to vector<1x32xf32>
    %20 = vector.extract_strided_slice %13 {offsets = [6, 0], sizes = [1, 32], strides = [1, 1]} : vector<8x128xf32> to vector<1x32xf32>
    %21 = vector.extract_strided_slice %13 {offsets = [7, 0], sizes = [1, 32], strides = [1, 1]} : vector<8x128xf32> to vector<1x32xf32>
    %cst = arith.constant dense<0.000000e+00> : vector<16x96xf32>
    %22 = tpu.matmul %3, %5, %cst {dimension_numbers = #tpu.dot_dimension_numbers<[1], [0], [0], [1], [0, 0, 1, 1], [], []>} : vector<16x32xf32>, vector<32x96xf32>, vector<16x96xf32> -> vector<16x96xf32>
    %23 = vector.broadcast %14 : vector<1x96xf32> to vector<16x96xf32>
    %24 = arith.addf %22, %23 : vector<16x96xf32>
    %25 = vector.extract_strided_slice %24 {offsets = [0, 0], sizes = [16, 8], strides = [1, 1]} : vector<16x96xf32> to vector<16x8xf32>
    %26 = vector.shape_cast %25 : vector<16x8xf32> to vector<2x8x8xf32>
    %27 = vector.extract_strided_slice %24 {offsets = [0, 32], sizes = [16, 8], strides = [1, 1]} : vector<16x96xf32> to vector<16x8xf32>
    %28 = vector.shape_cast %27 : vector<16x8xf32> to vector<2x8x8xf32>
    %29 = vector.extract_strided_slice %24 {offsets = [0, 64], sizes = [16, 8], strides = [1, 1]} : vector<16x96xf32> to vector<16x8xf32>
    %30 = vector.shape_cast %29 : vector<16x8xf32> to vector<2x8x8xf32>
    "tpu.trace_start"() <{level = 10 : i32, message = "bqd,bkd->bqk"}> : () -> ()
    %cst_17 = arith.constant dense<0.000000e+00> : vector<2x8x8xf32>
    %31 = tpu.matmul %26, %28, %cst_17 {dimension_numbers = #tpu.dot_dimension_numbers<[2], [2], [1], [1], [0, 0, 0, 1, 1, 1], [0], [0]>} : vector<2x8x8xf32>, vector<2x8x8xf32>, vector<2x8x8xf32> -> vector<2x8x8xf32>
    "tpu.trace_stop"() : () -> ()
    %cst_18 = arith.constant 0.353553385 : f32
    %32 = vector.broadcast %cst_18 : f32 to vector<2x8x8xf32>
    %33 = arith.mulf %31, %32 : vector<2x8x8xf32>
    %cst_19 = arith.constant dense<0xFF800000> : vector<2x8xf32>
    %34 = vector.multi_reduction <maximumf>, %33, %cst_19 [2] : vector<2x8x8xf32> to vector<2x8xf32>
    %35 = vector.shape_cast %34 : vector<2x8xf32> to vector<2x8x1xf32>
    %36 = vector.broadcast %35 : vector<2x8x1xf32> to vector<2x8x8xf32>
    %37 = arith.subf %33, %36 : vector<2x8x8xf32>
    %38 = math.exp %37 : vector<2x8x8xf32>
    %cst_20 = arith.constant dense<0.000000e+00> : vector<2x8xf32>
    %39 = vector.multi_reduction <add>, %38, %cst_20 [2] : vector<2x8x8xf32> to vector<2x8xf32>
    %40 = vector.shape_cast %39 : vector<2x8xf32> to vector<2x8x1xf32>
    %41 = tpu.reciprocal %40 {approx = true} : vector<2x8x1xf32> -> vector<2x8x1xf32>
    %42 = vector.broadcast %41 : vector<2x8x1xf32> to vector<2x8x8xf32>
    %43 = arith.mulf %38, %42 : vector<2x8x8xf32>
    "tpu.trace_start"() <{level = 10 : i32, message = "bqk,bkd->bqd"}> : () -> ()
    %cst_21 = arith.constant dense<0.000000e+00> : vector<2x8x8xf32>
    %44 = tpu.matmul %43, %30, %cst_21 {dimension_numbers = #tpu.dot_dimension_numbers<[2], [1], [1], [2], [0, 0, 0, 1, 1, 2], [0], [0]>} : vector<2x8x8xf32>, vector<2x8x8xf32>, vector<2x8x8xf32> -> vector<2x8x8xf32>
    "tpu.trace_stop"() : () -> ()
    %45 = vector.shape_cast %44 : vector<2x8x8xf32> to vector<16x8xf32>
    %46 = vector.extract_strided_slice %7 {offsets = [0, 0], sizes = [8, 32], strides = [1, 1]} : vector<32x32xf32> to vector<8x32xf32>
    %cst_22 = arith.constant dense<0.000000e+00> : vector<16x32xf32>
    %47 = tpu.matmul %45, %46, %cst_22 {dimension_numbers = #tpu.dot_dimension_numbers<[1], [0], [0], [1], [0, 0, 1, 1], [], []>} : vector<16x8xf32>, vector<8x32xf32>, vector<16x32xf32> -> vector<16x32xf32>
    %48 = vector.extract_strided_slice %24 {offsets = [0, 8], sizes = [16, 8], strides = [1, 1]} : vector<16x96xf32> to vector<16x8xf32>
    %49 = vector.shape_cast %48 : vector<16x8xf32> to vector<2x8x8xf32>
    %50 = vector.extract_strided_slice %24 {offsets = [0, 40], sizes = [16, 8], strides = [1, 1]} : vector<16x96xf32> to vector<16x8xf32>
    %51 = vector.shape_cast %50 : vector<16x8xf32> to vector<2x8x8xf32>
    %52 = vector.extract_strided_slice %24 {offsets = [0, 72], sizes = [16, 8], strides = [1, 1]} : vector<16x96xf32> to vector<16x8xf32>
    %53 = vector.shape_cast %52 : vector<16x8xf32> to vector<2x8x8xf32>
    "tpu.trace_start"() <{level = 10 : i32, message = "bqd,bkd->bqk"}> : () -> ()
    %cst_23 = arith.constant dense<0.000000e+00> : vector<2x8x8xf32>
    %54 = tpu.matmul %49, %51, %cst_23 {dimension_numbers = #tpu.dot_dimension_numbers<[2], [2], [1], [1], [0, 0, 0, 1, 1, 1], [0], [0]>} : vector<2x8x8xf32>, vector<2x8x8xf32>, vector<2x8x8xf32> -> vector<2x8x8xf32>
    "tpu.trace_stop"() : () -> ()
    %cst_24 = arith.constant 0.353553385 : f32
    %55 = vector.broadcast %cst_24 : f32 to vector<2x8x8xf32>
    %56 = arith.mulf %54, %55 : vector<2x8x8xf32>
    %cst_25 = arith.constant dense<0xFF800000> : vector<2x8xf32>
    %57 = vector.multi_reduction <maximumf>, %56, %cst_25 [2] : vector<2x8x8xf32> to vector<2x8xf32>
    %58 = vector.shape_cast %57 : vector<2x8xf32> to vector<2x8x1xf32>
    %59 = vector.broadcast %58 : vector<2x8x1xf32> to vector<2x8x8xf32>
    %60 = arith.subf %56, %59 : vector<2x8x8xf32>
    %61 = math.exp %60 : vector<2x8x8xf32>
    %cst_26 = arith.constant dense<0.000000e+00> : vector<2x8xf32>
    %62 = vector.multi_reduction <add>, %61, %cst_26 [2] : vector<2x8x8xf32> to vector<2x8xf32>
    %63 = vector.shape_cast %62 : vector<2x8xf32> to vector<2x8x1xf32>
    %64 = tpu.reciprocal %63 {approx = true} : vector<2x8x1xf32> -> vector<2x8x1xf32>
    %65 = vector.broadcast %64 : vector<2x8x1xf32> to vector<2x8x8xf32>
    %66 = arith.mulf %61, %65 : vector<2x8x8xf32>
    "tpu.trace_start"() <{level = 10 : i32, message = "bqk,bkd->bqd"}> : () -> ()
    %cst_27 = arith.constant dense<0.000000e+00> : vector<2x8x8xf32>
    %67 = tpu.matmul %66, %53, %cst_27 {dimension_numbers = #tpu.dot_dimension_numbers<[2], [1], [1], [2], [0, 0, 0, 1, 1, 2], [0], [0]>} : vector<2x8x8xf32>, vector<2x8x8xf32>, vector<2x8x8xf32> -> vector<2x8x8xf32>
    "tpu.trace_stop"() : () -> ()
    %68 = vector.shape_cast %67 : vector<2x8x8xf32> to vector<16x8xf32>
    %69 = vector.extract_strided_slice %7 {offsets = [8, 0], sizes = [8, 32], strides = [1, 1]} : vector<32x32xf32> to vector<8x32xf32>
    %cst_28 = arith.constant dense<0.000000e+00> : vector<16x32xf32>
    %70 = tpu.matmul %68, %69, %cst_28 {dimension_numbers = #tpu.dot_dimension_numbers<[1], [0], [0], [1], [0, 0, 1, 1], [], []>} : vector<16x8xf32>, vector<8x32xf32>, vector<16x32xf32> -> vector<16x32xf32>
    %71 = arith.addf %47, %70 : vector<16x32xf32>
    %72 = vector.extract_strided_slice %24 {offsets = [0, 16], sizes = [16, 8], strides = [1, 1]} : vector<16x96xf32> to vector<16x8xf32>
    %73 = vector.shape_cast %72 : vector<16x8xf32> to vector<2x8x8xf32>
    %74 = vector.extract_strided_slice %24 {offsets = [0, 48], sizes = [16, 8], strides = [1, 1]} : vector<16x96xf32> to vector<16x8xf32>
    %75 = vector.shape_cast %74 : vector<16x8xf32> to vector<2x8x8xf32>
    %76 = vector.extract_strided_slice %24 {offsets = [0, 80], sizes = [16, 8], strides = [1, 1]} : vector<16x96xf32> to vector<16x8xf32>
    %77 = vector.shape_cast %76 : vector<16x8xf32> to vector<2x8x8xf32>
    "tpu.trace_start"() <{level = 10 : i32, message = "bqd,bkd->bqk"}> : () -> ()
    %cst_29 = arith.constant dense<0.000000e+00> : vector<2x8x8xf32>
    %78 = tpu.matmul %73, %75, %cst_29 {dimension_numbers = #tpu.dot_dimension_numbers<[2], [2], [1], [1], [0, 0, 0, 1, 1, 1], [0], [0]>} : vector<2x8x8xf32>, vector<2x8x8xf32>, vector<2x8x8xf32> -> vector<2x8x8xf32>
    "tpu.trace_stop"() : () -> ()
    %cst_30 = arith.constant 0.353553385 : f32
    %79 = vector.broadcast %cst_30 : f32 to vector<2x8x8xf32>
    %80 = arith.mulf %78, %79 : vector<2x8x8xf32>
    %cst_31 = arith.constant dense<0xFF800000> : vector<2x8xf32>
    %81 = vector.multi_reduction <maximumf>, %80, %cst_31 [2] : vector<2x8x8xf32> to vector<2x8xf32>
    %82 = vector.shape_cast %81 : vector<2x8xf32> to vector<2x8x1xf32>
    %83 = vector.broadcast %82 : vector<2x8x1xf32> to vector<2x8x8xf32>
    %84 = arith.subf %80, %83 : vector<2x8x8xf32>
    %85 = math.exp %84 : vector<2x8x8xf32>
    %cst_32 = arith.constant dense<0.000000e+00> : vector<2x8xf32>
    %86 = vector.multi_reduction <add>, %85, %cst_32 [2] : vector<2x8x8xf32> to vector<2x8xf32>
    %87 = vector.shape_cast %86 : vector<2x8xf32> to vector<2x8x1xf32>
    %88 = tpu.reciprocal %87 {approx = true} : vector<2x8x1xf32> -> vector<2x8x1xf32>
    %89 = vector.broadcast %88 : vector<2x8x1xf32> to vector<2x8x8xf32>
    %90 = arith.mulf %85, %89 : vector<2x8x8xf32>
    "tpu.trace_start"() <{level = 10 : i32, message = "bqk,bkd->bqd"}> : () -> ()
    %cst_33 = arith.constant dense<0.000000e+00> : vector<2x8x8xf32>
    %91 = tpu.matmul %90, %77, %cst_33 {dimension_numbers = #tpu.dot_dimension_numbers<[2], [1], [1], [2], [0, 0, 0, 1, 1, 2], [0], [0]>} : vector<2x8x8xf32>, vector<2x8x8xf32>, vector<2x8x8xf32> -> vector<2x8x8xf32>
    "tpu.trace_stop"() : () -> ()
    %92 = vector.shape_cast %91 : vector<2x8x8xf32> to vector<16x8xf32>
    %93 = vector.extract_strided_slice %7 {offsets = [16, 0], sizes = [8, 32], strides = [1, 1]} : vector<32x32xf32> to vector<8x32xf32>
    %cst_34 = arith.constant dense<0.000000e+00> : vector<16x32xf32>
    %94 = tpu.matmul %92, %93, %cst_34 {dimension_numbers = #tpu.dot_dimension_numbers<[1], [0], [0], [1], [0, 0, 1, 1], [], []>} : vector<16x8xf32>, vector<8x32xf32>, vector<16x32xf32> -> vector<16x32xf32>
    %95 = arith.addf %71, %94 : vector<16x32xf32>
    %96 = vector.extract_strided_slice %24 {offsets = [0, 24], sizes = [16, 8], strides = [1, 1]} : vector<16x96xf32> to vector<16x8xf32>
    %97 = vector.shape_cast %96 : vector<16x8xf32> to vector<2x8x8xf32>
    %98 = vector.extract_strided_slice %24 {offsets = [0, 56], sizes = [16, 8], strides = [1, 1]} : vector<16x96xf32> to vector<16x8xf32>
    %99 = vector.shape_cast %98 : vector<16x8xf32> to vector<2x8x8xf32>
    %100 = vector.extract_strided_slice %24 {offsets = [0, 88], sizes = [16, 8], strides = [1, 1]} : vector<16x96xf32> to vector<16x8xf32>
    %101 = vector.shape_cast %100 : vector<16x8xf32> to vector<2x8x8xf32>
    "tpu.trace_start"() <{level = 10 : i32, message = "bqd,bkd->bqk"}> : () -> ()
    %cst_35 = arith.constant dense<0.000000e+00> : vector<2x8x8xf32>
    %102 = tpu.matmul %97, %99, %cst_35 {dimension_numbers = #tpu.dot_dimension_numbers<[2], [2], [1], [1], [0, 0, 0, 1, 1, 1], [0], [0]>} : vector<2x8x8xf32>, vector<2x8x8xf32>, vector<2x8x8xf32> -> vector<2x8x8xf32>
    "tpu.trace_stop"() : () -> ()
    %cst_36 = arith.constant 0.353553385 : f32
    %103 = vector.broadcast %cst_36 : f32 to vector<2x8x8xf32>
    %104 = arith.mulf %102, %103 : vector<2x8x8xf32>
    %cst_37 = arith.constant dense<0xFF800000> : vector<2x8xf32>
    %105 = vector.multi_reduction <maximumf>, %104, %cst_37 [2] : vector<2x8x8xf32> to vector<2x8xf32>
    %106 = vector.shape_cast %105 : vector<2x8xf32> to vector<2x8x1xf32>
    %107 = vector.broadcast %106 : vector<2x8x1xf32> to vector<2x8x8xf32>
    %108 = arith.subf %104, %107 : vector<2x8x8xf32>
    %109 = math.exp %108 : vector<2x8x8xf32>
    %cst_38 = arith.constant dense<0.000000e+00> : vector<2x8xf32>
    %110 = vector.multi_reduction <add>, %109, %cst_38 [2] : vector<2x8x8xf32> to vector<2x8xf32>
    %111 = vector.shape_cast %110 : vector<2x8xf32> to vector<2x8x1xf32>
    %112 = tpu.reciprocal %111 {approx = true} : vector<2x8x1xf32> -> vector<2x8x1xf32>
    %113 = vector.broadcast %112 : vector<2x8x1xf32> to vector<2x8x8xf32>
    %114 = arith.mulf %109, %113 : vector<2x8x8xf32>
    "tpu.trace_start"() <{level = 10 : i32, message = "bqk,bkd->bqd"}> : () -> ()
    %cst_39 = arith.constant dense<0.000000e+00> : vector<2x8x8xf32>
    %115 = tpu.matmul %114, %101, %cst_39 {dimension_numbers = #tpu.dot_dimension_numbers<[2], [1], [1], [2], [0, 0, 0, 1, 1, 2], [0], [0]>} : vector<2x8x8xf32>, vector<2x8x8xf32>, vector<2x8x8xf32> -> vector<2x8x8xf32>
    "tpu.trace_stop"() : () -> ()
    %116 = vector.shape_cast %115 : vector<2x8x8xf32> to vector<16x8xf32>
    %117 = vector.extract_strided_slice %7 {offsets = [24, 0], sizes = [8, 32], strides = [1, 1]} : vector<32x32xf32> to vector<8x32xf32>
    %cst_40 = arith.constant dense<0.000000e+00> : vector<16x32xf32>
    %118 = tpu.matmul %116, %117, %cst_40 {dimension_numbers = #tpu.dot_dimension_numbers<[1], [0], [0], [1], [0, 0, 1, 1], [], []>} : vector<16x8xf32>, vector<8x32xf32>, vector<16x32xf32> -> vector<16x32xf32>
    %119 = arith.addf %95, %118 : vector<16x32xf32>
    %120 = vector.broadcast %15 : vector<1x32xf32> to vector<16x32xf32>
    %121 = arith.addf %119, %120 : vector<16x32xf32>
    %122 = arith.addf %3, %121 : vector<16x32xf32>
    %cst_41 = arith.constant dense<0.000000e+00> : vector<16xf32>
    %123 = vector.multi_reduction <add>, %122, %cst_41 [1] : vector<16x32xf32> to vector<16xf32>
    %124 = vector.shape_cast %123 : vector<16xf32> to vector<16x1xf32>
    %cst_42 = arith.constant 3.200000e+01 : f32
    %125 = vector.broadcast %cst_42 : f32 to vector<16x1xf32>
    %126 = arith.divf %124, %125 : vector<16x1xf32>
    %127 = vector.broadcast %126 : vector<16x1xf32> to vector<16x32xf32>
    %128 = arith.subf %122, %127 : vector<16x32xf32>
    %129 = arith.mulf %128, %128 : vector<16x32xf32>
    %cst_43 = arith.constant dense<0.000000e+00> : vector<16xf32>
    %130 = vector.multi_reduction <add>, %129, %cst_43 [1] : vector<16x32xf32> to vector<16xf32>
    %131 = vector.shape_cast %130 : vector<16xf32> to vector<16x1xf32>
    %cst_44 = arith.constant 3.200000e+01 : f32
    %132 = vector.broadcast %cst_44 : f32 to vector<16x1xf32>
    %133 = arith.divf %131, %132 : vector<16x1xf32>
    %134 = vector.broadcast %126 : vector<16x1xf32> to vector<16x32xf32>
    %135 = arith.subf %122, %134 : vector<16x32xf32>
    %cst_45 = arith.constant 9.99999974E-6 : f32
    %136 = vector.broadcast %cst_45 : f32 to vector<16x1xf32>
    %137 = arith.addf %133, %136 : vector<16x1xf32>
    %138 = math.rsqrt %137 : vector<16x1xf32>
    %139 = vector.broadcast %138 : vector<16x1xf32> to vector<16x32xf32>
    %140 = arith.mulf %135, %139 : vector<16x32xf32>
    %141 = vector.broadcast %16 : vector<1x32xf32> to vector<16x32xf32>
    %142 = arith.mulf %140, %141 : vector<16x32xf32>
    %143 = vector.broadcast %17 : vector<1x32xf32> to vector<16x32xf32>
    %144 = arith.addf %142, %143 : vector<16x32xf32>
    %cst_46 = arith.constant dense<0.000000e+00> : vector<16x64xf32>
    %145 = tpu.matmul %144, %9, %cst_46 {dimension_numbers = #tpu.dot_dimension_numbers<[1], [0], [0], [1], [0, 0, 1, 1], [], []>} : vector<16x32xf32>, vector<32x64xf32>, vector<16x64xf32> -> vector<16x64xf32>
    %146 = vector.broadcast %18 : vector<1x64xf32> to vector<16x64xf32>
    %147 = arith.addf %145, %146 : vector<16x64xf32>
    %cst_47 = arith.constant 0.000000e+00 : f32
    %148 = vector.broadcast %cst_47 : f32 to vector<16x64xf32>
    %149 = arith.maximumf %147, %148 : vector<16x64xf32>
    %cst_48 = arith.constant dense<0.000000e+00> : vector<16x32xf32>
    %150 = tpu.matmul %149, %11, %cst_48 {dimension_numbers = #tpu.dot_dimension_numbers<[1], [0], [0], [1], [0, 0, 1, 1], [], []>} : vector<16x64xf32>, vector<64x32xf32>, vector<16x32xf32> -> vector<16x32xf32>
    %151 = vector.broadcast %19 : vector<1x32xf32> to vector<16x32xf32>
    %152 = arith.addf %150, %151 : vector<16x32xf32>
    %153 = arith.addf %144, %152 : vector<16x32xf32>
    %cst_49 = arith.constant dense<0.000000e+00> : vector<16xf32>
    %154 = vector.multi_reduction <add>, %153, %cst_49 [1] : vector<16x32xf32> to vector<16xf32>
    %155 = vector.shape_cast %154 : vector<16xf32> to vector<16x1xf32>
    %cst_50 = arith.constant 3.200000e+01 : f32
    %156 = vector.broadcast %cst_50 : f32 to vector<16x1xf32>
    %157 = arith.divf %155, %156 : vector<16x1xf32>
    %158 = vector.broadcast %157 : vector<16x1xf32> to vector<16x32xf32>
    %159 = arith.subf %153, %158 : vector<16x32xf32>
    %160 = arith.mulf %159, %159 : vector<16x32xf32>
    %cst_51 = arith.constant dense<0.000000e+00> : vector<16xf32>
    %161 = vector.multi_reduction <add>, %160, %cst_51 [1] : vector<16x32xf32> to vector<16xf32>
    %162 = vector.shape_cast %161 : vector<16xf32> to vector<16x1xf32>
    %cst_52 = arith.constant 3.200000e+01 : f32
    %163 = vector.broadcast %cst_52 : f32 to vector<16x1xf32>
    %164 = arith.divf %162, %163 : vector<16x1xf32>
    %165 = vector.broadcast %157 : vector<16x1xf32> to vector<16x32xf32>
    %166 = arith.subf %153, %165 : vector<16x32xf32>
    %cst_53 = arith.constant 9.99999974E-6 : f32
    %167 = vector.broadcast %cst_53 : f32 to vector<16x1xf32>
    %168 = arith.addf %164, %167 : vector<16x1xf32>
    %169 = math.rsqrt %168 : vector<16x1xf32>
    %170 = vector.broadcast %169 : vector<16x1xf32> to vector<16x32xf32>
    %171 = arith.mulf %166, %170 : vector<16x32xf32>
    %172 = vector.broadcast %20 : vector<1x32xf32> to vector<16x32xf32>
    %173 = arith.mulf %171, %172 : vector<16x32xf32>
    %174 = vector.broadcast %21 : vector<1x32xf32> to vector<16x32xf32>
    %175 = arith.addf %173, %174 : vector<16x32xf32>
    %c0_54 = arith.constant 0 : index
    %c0_55 = arith.constant 0 : index
    %176 = vector.load %arg8[%c0_54, %c0_55] : memref<16x32xf32, #tpu.memory_space<vmem>>, vector<16x32xf32>
    tpu.vector_store %arg8[%c0_54, %c0_55], %175 {strides = array<i32>} : memref<16x32xf32, #tpu.memory_space<vmem>>, vector<16x32xf32>,
    %c1_i32 = arith.constant 1 : i32
    %177 = arith.cmpi eq, %arg0, %c1_i32 : i32
    %178 = arith.extui %177 : i1 to i32
    %c0_i32_56 = arith.constant 0 : i32
    %179 = arith.cmpi ne, %178, %c0_i32_56 : i32
    scf.if %179 {
      %180 = vector.shape_cast %175 : vector<16x32xf32> to vector<2x8x32xf32>
      %c0_57 = arith.constant 0 : index
      %c0_58 = arith.constant 0 : index
      %c0_59 = arith.constant 0 : index
      %181 = vector.load %arg7[%c0_57, %c0_58, %c0_59] : memref<2x8x32xf32, #tpu.memory_space<vmem>>, vector<2x8x32xf32>
      tpu.vector_store %arg7[%c0_57, %c0_58, %c0_59], %180 {strides = array<i32>} : memref<2x8x32xf32, #tpu.memory_space<vmem>>, vector<2x8x32xf32>,
    } else {
    }
    return
  }
  func.func @transform_0(%arg0: i32) -> (i32, i32, i32) {
    %c0_i32 = arith.constant 0 : i32
    %c0_i32_0 = arith.constant 0 : i32
    %c0_i32_1 = arith.constant 0 : i32
    %c0_i32_2 = arith.constant 0 : i32
    return %c0_i32, %c0_i32_0, %c0_i32_1 : i32, i32, i32
  }
  func.func @transform_1(%arg0: i32) -> (i32, i32, i32) {
    %c0_i32 = arith.constant 0 : i32
    %c0_i32_0 = arith.constant 0 : i32
    %c0_i32_1 = arith.constant 0 : i32
    return %arg0, %c0_i32, %c0_i32_0 : i32, i32, i32
  }
  func.func @transform_2(%arg0: i32) -> (i32, i32, i32) {
    %c0_i32 = arith.constant 0 : i32
    %c0_i32_0 = arith.constant 0 : i32
    %c0_i32_1 = arith.constant 0 : i32
    return %arg0, %c0_i32, %c0_i32_0 : i32, i32, i32
  }
  func.func @transform_3(%arg0: i32) -> (i32, i32, i32) {
    %c0_i32 = arith.constant 0 : i32
    %c0_i32_0 = arith.constant 0 : i32
    %c0_i32_1 = arith.constant 0 : i32
    return %arg0, %c0_i32, %c0_i32_0 : i32, i32, i32
  }
  func.func @transform_4(%arg0: i32) -> (i32, i32, i32) {
    %c0_i32 = arith.constant 0 : i32
    %c0_i32_0 = arith.constant 0 : i32
    %c0_i32_1 = arith.constant 0 : i32
    return %arg0, %c0_i32, %c0_i32_0 : i32, i32, i32
  }
  func.func @transform_5(%arg0: i32) -> (i32, i32, i32) {
    %c0_i32 = arith.constant 0 : i32
    %c0_i32_0 = arith.constant 0 : i32
    %c0_i32_1 = arith.constant 0 : i32
    return %arg0, %c0_i32, %c0_i32_0 : i32, i32, i32
  }
  func.func @transform_6(%arg0: i32) -> (i32, i32, i32) {
    %c0_i32 = arith.constant 0 : i32
    %c0_i32_0 = arith.constant 0 : i32
    %c0_i32_1 = arith.constant 0 : i32
    %c0_i32_2 = arith.constant 0 : i32
    return %c0_i32, %c0_i32_0, %c0_i32_1 : i32, i32, i32
  }
}

</mosaic_0001>

<llo_original>
// kernel: tpu_custom_call.1
$region0: #{tpu_custom_call.1}
  #allocation0 [shape = 'u32[]', space=smem, size = 0x4, offset = 0x4, fixed_abs, tag = 'smem constant byte address 0x4 - core index']
  #allocation1 [shape = 'u32[72,128]{1,0:T(1,128)}', space=vmem, size = 0x9000, scoped, tag = 'internal scratch']
  #allocation2 [shape = 'f32[16,32]{1,0:T(8,128)}', space=vmem, size = 0x2000, scoped, tag = 'scratch operand']
  %s0 = inlined_call_operand.hbm [shape: f32[2,8,32], index: 0, kind: input, shape index: {}]
  %s1 = inlined_call_operand.vmem [shape: f32[2,32,96], index: 1, kind: input, shape index: {}]
  %s2 = inlined_call_operand.vmem [shape: f32[2,32,32], index: 2, kind: input, shape index: {}]
  %s3 = inlined_call_operand.vmem [shape: f32[2,32,64], index: 3, kind: input, shape index: {}]
  %s4 = inlined_call_operand.vmem [shape: f32[2,64,32], index: 4, kind: input, shape index: {}]
  %s5 = inlined_call_operand.hbm [shape: f32[2,8,128], index: 5, kind: input, shape index: {}]
  %s6 = inlined_call_operand.hbm [shape: f32[2,8,32], index: 6, kind: output, shape index: {}]
  %s7 = sld [smem:[#allocation0]]
  $region73: #{tpu_custom_call.1} parent=0
    _
  %s9 = ssub.s32 1, %s7
  %s10 = scalar_select 0, %s9, %s7
  $region1: #{tpu_custom_call.1} parent=0
    #allocation3 [shape = 'u8[8192]{0}', space=vmem, size = 0x2000, scoped, tag = 'input window, operand 0, single buffered']
    #allocation4 [shape = 's32[2]{0}', space=sflag, size = 0x8, scoped, tag = 'scoped memory for tpu_custom_call.1']
    #allocation5 [shape = 's32[2]{0}', space=sflag, size = 0x8, scoped, tag = 'scoped memory for tpu_custom_call.1']
    #allocation6 [shape = 'u8[8192]{0}', space=vmem, size = 0x2000, scoped, tag = 'input window, operand 5']
    #allocation7 [shape = 's32[2]{0}', space=sflag, size = 0x8, scoped, tag = 'scoped memory for tpu_custom_call.1']
    #allocation8 [shape = 'u8[8192]{0}', space=vmem, size = 0x2000, scoped, tag = 'output window, operand 0, single buffered']
    %11 = vsyncpa [#allocation4], 0
    %12 = vsyncpa [#allocation7], 0
    %s13 = scalar_lea.sflag [#allocation7], 1
    %14 = vsyncpa %s13, 0
    %15 = vsyncpa [#allocation5], 0
    loop: start=0, step=1, limit=4
    $region2: #{tpu_custom_call.1} parent=1 // loop_pre_header
      _
    $region3: #{tpu_custom_call.1} parent=1 // loop_header
      %s17 = sphi 0, %s21
      %p18 = scmp.ge.s32.totalorder %s17, 4
      %s25 = sphi 0, %s25
      %s27 = sphi 0, %s25
      %s28 = sphi 0, %s27
      %s42 = sphi 0, %s28
      %s48 = sphi 0, %s50
      %s51 = sphi 0, %s48
      %s52 = sphi 0, %s51
      %s68 = sphi 0, %s52
      %s74 = sphi 0, %s76
      %s77 = sphi 0, %s74
      %s78 = sphi 0, %s77
      %s94 = sphi 0, %s78
      %s100 = sphi 0, %s102
      %s103 = sphi 0, %s100
      %s104 = sphi 0, %s103
      %s120 = sphi 0, %s104
      %s126 = sphi 0, %s128
      %s129 = sphi 0, %s126
      %s130 = sphi 0, %s129
      %s146 = sphi 0, %s130
      %s152 = sphi 0, %s154
      %s155 = sphi 0, %s152
      %s156 = sphi 0, %s155
      %s172 = sphi 0, %s156
      %s176 = sphi 0, %s176
      %s178 = sphi 0, %s176
      %s179 = sphi 0, %s178
      %s193 = sphi 0, %s179
    $region4: #{tpu_custom_call.1} parent=1 // loop_header_branch
      %20 = sbr.rel (%p18) target = $region8
    $region5: #{tpu_custom_call.1} parent=1 // loop_body
      %s22 = ssub.s32 %s17, 1
      %s23 = ssub.s32 %s17, 2
      %s24 = sadd.s32 %s17, 1
      %s26 = sadd.s32 %s25, 1
      %p29 = scmp.eq.s32.totalorder %s17, 1
      %p30 = scmp.ne.s32.totalorder %s25, %s27
      %p31 = scmp.eq.s32.totalorder %s17, 0
      %p32 = por %p30, %p31
      %p33 = scmp.ne.s32.totalorder %s25, %s27
      %p34 = scmp.eq.s32.totalorder %s22, 1
      %p35 = por %p33, %p34
      %p36 = scmp.ne.s32.totalorder %s27, %s28
      %p37 = scmp.eq.s32.totalorder %s22, 0
      %p38 = por %p36, %p37
      %p39 = scmp.ne.s32.totalorder %s27, %s28
      %p40 = scmp.eq.s32.totalorder %s23, 1
      %p41 = por %p39, %p40
      %p43 = scmp.ne.s32.totalorder %s28, %s42
      %p44 = scmp.eq.s32.totalorder %s23, 0
      %p45 = por %p43, %p44
      %s46 = ssub.s32 %s17, %s24
      %p47 = scmp.eq.s32.totalorder %s46, 0
      %s49 = sadd.s32 %s48, 1
      %s50 = scalar_select %p47, %s48, %s49
      %p53 = pneg %p47
      %p54 = scmp.eq.s32.totalorder %s17, 1
      %p55 = por %p53, %p54
      %p56 = scmp.ne.s32.totalorder %s48, %s51
      %p57 = scmp.eq.s32.totalorder %s17, 0
      %p58 = por %p56, %p57
      %p59 = scmp.ne.s32.totalorder %s48, %s51
      %p60 = scmp.eq.s32.totalorder %s22, 1
      %p61 = por %p59, %p60
      %p62 = scmp.ne.s32.totalorder %s51, %s52
      %p63 = scmp.eq.s32.totalorder %s22, 0
      %p64 = por %p62, %p63
      %p65 = scmp.ne.s32.totalorder %s51, %s52
      %p66 = scmp.eq.s32.totalorder %s23, 1
      %p67 = por %p65, %p66
      %p69 = scmp.ne.s32.totalorder %s52, %s68
      %p70 = scmp.eq.s32.totalorder %s23, 0
      %p71 = por %p69, %p70
      %s72 = ssub.s32 %s17, %s24
      %p73 = scmp.eq.s32.totalorder %s72, 0
      %s75 = sadd.s32 %s74, 1
      %s76 = scalar_select %p73, %s74, %s75
      %p79 = pneg %p73
      %p80 = scmp.eq.s32.totalorder %s17, 1
      %p81 = por %p79, %p80
      %p82 = scmp.ne.s32.totalorder %s74, %s77
      %p83 = scmp.eq.s32.totalorder %s17, 0
      %p84 = por %p82, %p83
      %p85 = scmp.ne.s32.totalorder %s74, %s77
      %p86 = scmp.eq.s32.totalorder %s22, 1
      %p87 = por %p85, %p86
      %p88 = scmp.ne.s32.totalorder %s77, %s78
      %p89 = scmp.eq.s32.totalorder %s22, 0
      %p90 = por %p88, %p89
      %p91 = scmp.ne.s32.totalorder %s77, %s78
      %p92 = scmp.eq.s32.totalorder %s23, 1
      %p93 = por %p91, %p92
      %p95 = scmp.ne.s32.totalorder %s78, %s94
      %p96 = scmp.eq.s32.totalorder %s23, 0
      %p97 = por %p95, %p96
      %s98 = ssub.s32 %s17, %s24
      %p99 = scmp.eq.s32.totalorder %s98, 0
      %s101 = sadd.s32 %s100, 1
      %s102 = scalar_select %p99, %s100, %s101
      %p105 = pneg %p99
      %p106 = scmp.eq.s32.totalorder %s17, 1
      %p107 = por %p105, %p106
      %p108 = scmp.ne.s32.totalorder %s100, %s103
      %p109 = scmp.eq.s32.totalorder %s17, 0
      %p110 = por %p108, %p109
      %p111 = scmp.ne.s32.totalorder %s100, %s103
      %p112 = scmp.eq.s32.totalorder %s22, 1
      %p113 = por %p111, %p112
      %p114 = scmp.ne.s32.totalorder %s103, %s104
      %p115 = scmp.eq.s32.totalorder %s22, 0
      %p116 = por %p114, %p115
      %p117 = scmp.ne.s32.totalorder %s103, %s104
      %p118 = scmp.eq.s32.totalorder %s23, 1
      %p119 = por %p117, %p118
      %p121 = scmp.ne.s32.totalorder %s104, %s120
      %p122 = scmp.eq.s32.totalorder %s23, 0
      %p123 = por %p121, %p122
      %s124 = ssub.s32 %s17, %s24
      %p125 = scmp.eq.s32.totalorder %s124, 0
      %s127 = sadd.s32 %s126, 1
      %s128 = scalar_select %p125, %s126, %s127
      %p131 = pneg %p125
      %p132 = scmp.eq.s32.totalorder %s17, 1
      %p133 = por %p131, %p132
      %p134 = scmp.ne.s32.totalorder %s126, %s129
      %p135 = scmp.eq.s32.totalorder %s17, 0
      %p136 = por %p134, %p135
      %p137 = scmp.ne.s32.totalorder %s126, %s129
      %p138 = scmp.eq.s32.totalorder %s22, 1
      %p139 = por %p137, %p138
      %p140 = scmp.ne.s32.totalorder %s129, %s130
      %p141 = scmp.eq.s32.totalorder %s22, 0
      %p142 = por %p140, %p141
      %p143 = scmp.ne.s32.totalorder %s129, %s130
      %p144 = scmp.eq.s32.totalorder %s23, 1
      %p145 = por %p143, %p144
      %p147 = scmp.ne.s32.totalorder %s130, %s146
      %p148 = scmp.eq.s32.totalorder %s23, 0
      %p149 = por %p147, %p148
      %s150 = ssub.s32 %s17, %s24
      %p151 = scmp.eq.s32.totalorder %s150, 0
      %s153 = sadd.s32 %s152, 1
      %s154 = scalar_select %p151, %s152, %s153
      %p157 = pneg %p151
      %p158 = scmp.eq.s32.totalorder %s17, 1
      %p159 = por %p157, %p158
      %p160 = scmp.ne.s32.totalorder %s152, %s155
      %p161 = scmp.eq.s32.totalorder %s17, 0
      %p162 = por %p160, %p161
      %p163 = scmp.ne.s32.totalorder %s152, %s155
      %p164 = scmp.eq.s32.totalorder %s22, 1
      %p165 = por %p163, %p164
      %p166 = scmp.ne.s32.totalorder %s155, %s156
      %p167 = scmp.eq.s32.totalorder %s22, 0
      %p168 = por %p166, %p167
      %p169 = scmp.ne.s32.totalorder %s155, %s156
      %p170 = scmp.eq.s32.totalorder %s23, 1
      %p171 = por %p169, %p170
      %p173 = scmp.ne.s32.totalorder %s156, %s172
      %p174 = scmp.eq.s32.totalorder %s23, 0
      %p175 = por %p173, %p174
      %s177 = sadd.s32 %s176, 1
      %p180 = scmp.eq.s32.totalorder %s17, 1
      %p181 = scmp.ne.s32.totalorder %s176, %s178
      %p182 = scmp.eq.s32.totalorder %s17, 0
      %p183 = por %p181, %p182
      %p184 = scmp.ne.s32.totalorder %s176, %s178
      %p185 = scmp.eq.s32.totalorder %s22, 1
      %p186 = por %p184, %p185
      %p187 = scmp.ne.s32.totalorder %s178, %s179
      %p188 = scmp.eq.s32.totalorder %s22, 0
      %p189 = por %p187, %p188
      %p190 = scmp.ne.s32.totalorder %s178, %s179
      %p191 = scmp.eq.s32.totalorder %s23, 1
      %p192 = por %p190, %p191
      %p194 = scmp.ne.s32.totalorder %s179, %s193
      %p195 = scmp.eq.s32.totalorder %s23, 0
      %p196 = por %p194, %p195
      %p197 = scmp.le.s32.totalorder 1, %s17
      %p198 = scmp.lt.s32.totalorder %s17, 3
      %p199 = pnand %p197, %p198
      %p200 = pneg %p199
      // Predicated region
      $region9: #{tpu_custom_call.1} parent=5 // pred_check
        _
      $region10: #{tpu_custom_call.1} parent=5 // pred_check_branch
        %202 = sbr.rel (%p199) target = $region12
      $region11: #{tpu_custom_call.1} parent=5 // pred_region
        %s203 = ssub.s32 %s17, 1
        // Predicated region
        $region13: #{tpu_custom_call.1} parent=11 // pred_check
          %p204 = pneg %p38
        $region14: #{tpu_custom_call.1} parent=11 // pred_check_branch
          %206 = sbr.rel (%p204) target = $region16
        $region15: #{tpu_custom_call.1} parent=11 // pred_region
          %208 = vsyncadd [#allocation4], 0
          %s209 = sshll.u32 %s0, 4
          %s210 = int_to_ptr.hbm [resolvable:$true] %s209
          %s211 = sshll.u32 [#allocation3], 4
          %s212 = int_to_ptr.vmem [resolvable:$true] %s211
          %217 = dma.hbm_to_vmem [thread:$0]  %s210, 256, %s212, [#allocation4], 128, 128, 8
        $region16: #{tpu_custom_call.1} parent=11 // pred_fallthru
          _
      $region12: #{tpu_custom_call.1} parent=5 // pred_fallthru
        _
      %p218 = scmp.lt.s32.totalorder %s17, 2
      // Predicated region
      $region17: #{tpu_custom_call.1} parent=5 // pred_check
        %p219 = pneg %p218
      $region18: #{tpu_custom_call.1} parent=5 // pred_check_branch
        %221 = sbr.rel (%p219) target = $region20
      $region19: #{tpu_custom_call.1} parent=5 // pred_region
        // Predicated region
        $region21: #{tpu_custom_call.1} parent=19 // pred_check
          %p222 = pneg %p58
        $region22: #{tpu_custom_call.1} parent=19 // pred_check_branch
          %224 = sbr.rel (%p222) target = $region24
        $region23: #{tpu_custom_call.1} parent=19 // pred_region
          %p225 = scmp.lt.s32.totalorder %s17, 1
          %s226 = scalar_select %p225, %s17, 1
          %s227 = smul.addr %s226, 4
          %s228 = smul.addr %s227, 8
          %s229 = scalar_lea.vmem %s1, %s228
        $region24: #{tpu_custom_call.1} parent=19 // pred_fallthru
          _
        // Predicated region
        $region25: #{tpu_custom_call.1} parent=19 // pred_check
          %p230 = pneg %p84
        $region26: #{tpu_custom_call.1} parent=19 // pred_check_branch
          %232 = sbr.rel (%p230) target = $region28
        $region27: #{tpu_custom_call.1} parent=19 // pred_region
          %p233 = scmp.lt.s32.totalorder %s17, 1
          %s234 = scalar_select %p233, %s17, 1
          %s235 = smul.addr %s234, 4
          %s236 = smul.addr %s235, 8
          %s237 = scalar_lea.vmem %s2, %s236
        $region28: #{tpu_custom_call.1} parent=19 // pred_fallthru
          _
        // Predicated region
        $region29: #{tpu_custom_call.1} parent=19 // pred_check
          %p238 = pneg %p110
        $region30: #{tpu_custom_call.1} parent=19 // pred_check_branch
          %240 = sbr.rel (%p238) target = $region32
        $region31: #{tpu_custom_call.1} parent=19 // pred_region
          %p241 = scmp.lt.s32.totalorder %s17, 1
          %s242 = scalar_select %p241, %s17, 1
          %s243 = smul.addr %s242, 4
          %s244 = smul.addr %s243, 8
          %s245 = scalar_lea.vmem %s3, %s244
        $region32: #{tpu_custom_call.1} parent=19 // pred_fallthru
          _
        // Predicated region
        $region33: #{tpu_custom_call.1} parent=19 // pred_check
          %p246 = pneg %p136
        $region34: #{tpu_custom_call.1} parent=19 // pred_check_branch
          %248 = sbr.rel (%p246) target = $region36
        $region35: #{tpu_custom_call.1} parent=19 // pred_region
          %p249 = scmp.lt.s32.totalorder %s17, 1
          %s250 = scalar_select %p249, %s17, 1
          %s251 = smul.addr %s250, 8
          %s252 = smul.addr %s251, 8
          %s253 = scalar_lea.vmem %s4, %s252
        $region36: #{tpu_custom_call.1} parent=19 // pred_fallthru
          _
        // Predicated region
        $region37: #{tpu_custom_call.1} parent=19 // pred_check
          %p254 = pneg %p162
        $region38: #{tpu_custom_call.1} parent=19 // pred_check_branch
          %256 = sbr.rel (%p254) target = $region40
        $region39: #{tpu_custom_call.1} parent=19 // pred_region
          %s257 = sand.u32 %s152, 1
          %s258 = scalar_lea.sflag [#allocation7], %s257
          %s259 = sand.u32 %s152, 1
          %s260 = smul.addr %s259, 8
          %s261 = scalar_lea.vmem [#allocation6], %s260
          %263 = vsyncadd %s258, 0
          %s264 = smul.addr %s17, 8
          %s265 = scalar_lea.hbm %s5, %s264
          %s267 = sshll.u32 %s265, 4
          %s268 = int_to_ptr.hbm [resolvable:$true] %s267
          %s269 = sshll.u32 %s261, 4
          %s270 = int_to_ptr.vmem [resolvable:$true] %s269
          %272 = dma.hbm_to_vmem [thread:$0]  %s268, 128, %s270, %s258
        $region40: #{tpu_custom_call.1} parent=19 // pred_fallthru
          _
      $region20: #{tpu_custom_call.1} parent=5 // pred_fallthru
        _
      %p273 = scmp.le.s32.totalorder 1, %s17
      %p274 = scmp.lt.s32.totalorder %s17, 3
      %p275 = pnand %p273, %p274
      %p276 = pneg %p275
      // Predicated region
      $region41: #{tpu_custom_call.1} parent=5 // pred_check
        _
      $region42: #{tpu_custom_call.1} parent=5 // pred_check_branch
        %278 = sbr.rel (%p275) target = $region44
      $region43: #{tpu_custom_call.1} parent=5 // pred_region
        %s279 = ssub.s32 %s17, 1
        // Predicated region
        $region45: #{tpu_custom_call.1} parent=43 // pred_check
          %p280 = pneg %p38
        $region46: #{tpu_custom_call.1} parent=43 // pred_check_branch
          %282 = sbr.rel (%p280) target = $region48
        $region47: #{tpu_custom_call.1} parent=43 // pred_region
          %284 = dma.done [#allocation4], 256
        $region48: #{tpu_custom_call.1} parent=43 // pred_fallthru
          _
        %s285 = sand.u32 %s155, 1
        %s286 = scalar_lea.sflag [#allocation7], %s285
        %s287 = sand.u32 %s155, 1
        %s288 = smul.addr %s287, 8
        %s289 = scalar_lea.vmem [#allocation6], %s288
        // Predicated region
        $region49: #{tpu_custom_call.1} parent=43 // pred_check
          %p290 = pneg %p168
        $region50: #{tpu_custom_call.1} parent=43 // pred_check_branch
          %292 = sbr.rel (%p290) target = $region52
        $region51: #{tpu_custom_call.1} parent=43 // pred_region
          %294 = dma.done %s286, 128
        $region52: #{tpu_custom_call.1} parent=43 // pred_fallthru
          _
        %p295 = pneg %p38
        %p296 = pneg %p35
        %p297 = scmp.lt.s32.totalorder %s22, 1
        %s298 = scalar_select %p297, %s22, 1
        %s299 = smul.addr %s298, 4
        %s300 = smul.addr %s299, 8
        %s301 = scalar_lea.vmem %s1, %s300
        %p302 = pneg %p64
        %p303 = pneg %p61
        %p304 = scmp.lt.s32.totalorder %s22, 1
        %s305 = scalar_select %p304, %s22, 1
        %s306 = smul.addr %s305, 4
        %s307 = smul.addr %s306, 8
        %s308 = scalar_lea.vmem %s2, %s307
        %p309 = pneg %p90
        %p310 = pneg %p87
        %p311 = scmp.lt.s32.totalorder %s22, 1
        %s312 = scalar_select %p311, %s22, 1
        %s313 = smul.addr %s312, 4
        %s314 = smul.addr %s313, 8
        %s315 = scalar_lea.vmem %s3, %s314
        %p316 = pneg %p116
        %p317 = pneg %p113
        %p318 = scmp.lt.s32.totalorder %s22, 1
        %s319 = scalar_select %p318, %s22, 1
        %s320 = smul.addr %s319, 8
        %s321 = smul.addr %s320, 8
        %s322 = scalar_lea.vmem %s4, %s321
        %p323 = pneg %p142
        %p324 = pneg %p139
        %s325 = sand.u32 %s155, 1
        %s326 = scalar_lea.sflag [#allocation7], %s325
        %s327 = sand.u32 %s155, 1
        %s328 = smul.addr %s327, 8
        %s329 = scalar_lea.vmem [#allocation6], %s328
        %p330 = pneg %p168
        %p331 = pneg %p165
        %p332 = pneg %p189
        %p333 = pneg %p186
        %p334 = scmp.lt.s32.totalorder %s22, 1
        %s335 = scalar_select %p334, %s22, 1
        %s336 = smul.addr %s335, 4
        %s337 = smul.addr %s336, 8
        %s338 = scalar_lea.vmem %s1, %s337
        %p339 = scmp.lt.s32.totalorder %s22, 1
        %s340 = scalar_select %p339, %s22, 1
        %s341 = smul.addr %s340, 4
        %s342 = smul.addr %s341, 8
        %s343 = scalar_lea.vmem %s2, %s342
        %p344 = scmp.lt.s32.totalorder %s22, 1
        %s345 = scalar_select %p344, %s22, 1
        %s346 = smul.addr %s345, 4
        %s347 = smul.addr %s346, 8
        %s348 = scalar_lea.vmem %s3, %s347
        %p349 = scmp.lt.s32.totalorder %s22, 1
        %s350 = scalar_select %p349, %s22, 1
        %s351 = smul.addr %s350, 8
        %s352 = smul.addr %s351, 8
        %s353 = scalar_lea.vmem %s4, %s352
        %p354 = scmp.eq.s32.totalorder %s22, 0
        // Predicated region
        $region53: #{tpu_custom_call.1} parent=43 // pred_check
          %p355 = pneg %p354
        $region54: #{tpu_custom_call.1} parent=43 // pred_check_branch
          %357 = sbr.rel (%p355) target = $region56
        $region55: #{tpu_custom_call.1} parent=43 // pred_region
          %v358 = vld [vmem:[#allocation3] sm:$0xff]
          %v359 = vld [vmem:[#allocation3 + $0x8] sm:$0xff]
          %vm360 = vcmask 261120
          %361 = vst.msk [vmem:[#allocation2] sm:$0xff] %vm360, %v358
          %362 = vst.msk [vmem:[#allocation2 + $0x8] sm:$0xff] %vm360, %v359
        $region56: #{tpu_custom_call.1} parent=43 // pred_fallthru
          _
        %v363 = vld [vmem:[#allocation2] sm:$0xff]
        %v364 = vld [vmem:[#allocation2 + $0x8] sm:$0xff]
        %v365 = vld [vmem:[%s338] sm:$0xff]
        %v366 = vld [vmem:[%s338 + $0x8] sm:$0xff]
        %v367 = vld [vmem:[%s338 + $0x10] sm:$0xff]
        %v368 = vld [vmem:[%s338 + $0x18] sm:$0xff]
        %v369 = vld [vmem:[%s343] sm:$0xff]
        %v370 = vld [vmem:[%s343 + $0x8] sm:$0xff]
        %v371 = vld [vmem:[%s343 + $0x10] sm:$0xff]
        %v372 = vld [vmem:[%s343 + $0x18] sm:$0xff]
        %v373 = vld [vmem:[%s348] sm:$0xff]
        %v374 = vld [vmem:[%s348 + $0x8] sm:$0xff]
        %v375 = vld [vmem:[%s348 + $0x10] sm:$0xff]
        %v376 = vld [vmem:[%s348 + $0x18] sm:$0xff]
        %v377 = vld [vmem:[%s353] sm:$0xff]
        %v378 = vld [vmem:[%s353 + $0x8] sm:$0xff]
        %v379 = vld [vmem:[%s353 + $0x10] sm:$0xff]
        %v380 = vld [vmem:[%s353 + $0x18] sm:$0xff]
        %v381 = vld [vmem:[%s353 + $0x20] sm:$0xff]
        %v382 = vld [vmem:[%s353 + $0x28] sm:$0xff]
        %v383 = vld [vmem:[%s353 + $0x30] sm:$0xff]
        %v384 = vld [vmem:[%s353 + $0x38] sm:$0xff]
        %v385 = vld [vmem:[%s289] sm:$0xff]
        %v386 = vperm.slane %v385, 0
        %vm387 = vcmask 261120
        %v389 = vsel %vm387, %v363, 0
        %v392 = vsel %vm387, %v364, 0
        %394 = vmatpush.msra.mxu0 0.0
        %395 = vmatpush.msra.mxu0 0.0
        %396 = vmatpush.msra.mxu0 0.0
        %397 = vmatpush.msra.mxu0 0.0
        %398 = vmatpush.msra.mxu0 0.0
        %399 = vmatpush.msra.mxu0 0.0
        %400 = vmatpush.msra.mxu0 0.0
        %401 = vmatpush.msra.mxu0 0.0
        %402 = vmatpush.msra.mxu0 0.0
        %403 = vmatpush.msra.mxu0 0.0
        %404 = vmatpush.msra.mxu0 0.0
        %405 = vmatpush.msra.mxu0 0.0
        %406 = vmatpush.msra.mxu0 %v368
        %407 = vmatpush.msra.mxu0 %v367
        %408 = vmatpush.msra.mxu0 %v366
        %409 = vmatpush.msra.mxu0 %v365
        %410 = vmatmul.f32.gmra.mxu0 %v389
        %v411 = vpop.f32.mrf.mxu0
        %v412 = vadd.f32 %v386, %v411
        %413 = vmatmul.f32.gmra.mxu0 %v392
        %v414 = vpop.f32.mrf.mxu0
        %v415 = vadd.f32 %v386, %v414
        %416 = vdwg.mxu0
        %418 = vrot.lane.b32.xlu0 %v412, 96
        %v419 = vpop.permute.xlu0 %418
        %vm420 = vcmask 64512
        %v421 = vsel %vm420, %v412, 0
        %v423 = vsel %vm420, %v419, 0
        %425 = vmatpush.xpose.msra.mxu0 0.0
        %426 = vmatpush.xpose.msra.mxu0 0.0
        %427 = vmatpush.xpose.msra.mxu0 0.0
        %428 = vmatpush.xpose.msra.mxu0 0.0
        %429 = vmatpush.xpose.msra.mxu0 0.0
        %430 = vmatpush.xpose.msra.mxu0 0.0
        %431 = vmatpush.xpose.msra.mxu0 0.0
        %432 = vmatpush.xpose.msra.mxu0 0.0
        %433 = vmatpush.xpose.msra.mxu0 0.0
        %434 = vmatpush.xpose.msra.mxu0 0.0
        %435 = vmatpush.xpose.msra.mxu0 0.0
        %436 = vmatpush.xpose.msra.mxu0 0.0
        %437 = vmatpush.xpose.msra.mxu0 0.0
        %438 = vmatpush.xpose.msra.mxu0 0.0
        %439 = vmatpush.xpose.msra.mxu0 0.0
        %440 = vmatpush.xpose.msra.mxu0 %v423
        %441 = vmatmul.f32.gmra.mxu0 %v421
        %v442 = vpop.f32.mrf.mxu0
        %v443 = vadd.f32 0.0, %v442
        %444 = vdwg.mxu0
        %446 = vrot.lane.b32.xlu0 %v415, 96
        %v447 = vpop.permute.xlu0 %446
        %v448 = vsel %vm420, %v415, 0
        %v450 = vsel %vm420, %v447, 0
        %452 = vmatpush.xpose.msra.mxu0 0.0
        %453 = vmatpush.xpose.msra.mxu0 0.0
        %454 = vmatpush.xpose.msra.mxu0 0.0
        %455 = vmatpush.xpose.msra.mxu0 0.0
        %456 = vmatpush.xpose.msra.mxu0 0.0
        %457 = vmatpush.xpose.msra.mxu0 0.0
        %458 = vmatpush.xpose.msra.mxu0 0.0
        %459 = vmatpush.xpose.msra.mxu0 0.0
        %460 = vmatpush.xpose.msra.mxu0 0.0
        %461 = vmatpush.xpose.msra.mxu0 0.0
        %462 = vmatpush.xpose.msra.mxu0 0.0
        %463 = vmatpush.xpose.msra.mxu0 0.0
        %464 = vmatpush.xpose.msra.mxu0 0.0
        %465 = vmatpush.xpose.msra.mxu0 0.0
        %466 = vmatpush.xpose.msra.mxu0 0.0
        %467 = vmatpush.xpose.msra.mxu0 %v450
        %468 = vmatmul.f32.gmra.mxu0 %v448
        %v469 = vpop.f32.mrf.mxu0
        %v470 = vadd.f32 0.0, %v469
        %471 = vdwg.mxu0
        %v472 = vmul.f32 %v443, 0.35355338
        %v473 = vmul.f32 %v470, 0.35355338
        %v474 = vsel %vm420, %v472, -inf
        %475 = vmax.xlane.f32.xlu0 %v474
        %v476 = vpop.xlane.xlu0 %475
        %v477 = vsel %vm420, %v473, -inf
        %478 = vmax.xlane.f32.xlu0 %v477
        %v479 = vpop.xlane.xlu0 %478
        %v480 = vsub.f32 %v472, %v476
        %v481 = vsub.f32 %v473, %v479
        %v482 = vmul.f32 %v480, 1.442695
        %v483 = vpow.pop %v482
        %v484 = vmul.f32 %v481, 1.442695
        %v485 = vpow.pop %v484
        %v486 = vsel %vm420, %v483, 0.0
        %487 = vadd.xlane.f32.xlu0 %v486
        %v488 = vpop.xlane.xlu0 %487
        %v489 = vsel %vm420, %v485, 0.0
        %490 = vadd.xlane.f32.xlu0 %v489
        %v491 = vpop.xlane.xlu0 %490
        %v492 = vrcp.pop %v488
        %v493 = vrcp.pop %v491
        %v494 = vmul.f32 %v483, %v492
        %v495 = vmul.f32 %v485, %v493
        %496 = vrot.lane.b32.xlu0 %v412, 64
        %v497 = vpop.permute.xlu0 %496
        %v500 = vsel %vm420, %v494, 0
        %502 = vmatpush.msra.mxu0 0.0
        %503 = vmatpush.msra.mxu0 0.0
        %504 = vmatpush.msra.mxu0 0.0
        %505 = vmatpush.msra.mxu0 0.0
        %506 = vmatpush.msra.mxu0 0.0
        %507 = vmatpush.msra.mxu0 0.0
        %508 = vmatpush.msra.mxu0 0.0
        %509 = vmatpush.msra.mxu0 0.0
        %510 = vmatpush.msra.mxu0 0.0
        %511 = vmatpush.msra.mxu0 0.0
        %512 = vmatpush.msra.mxu0 0.0
        %513 = vmatpush.msra.mxu0 0.0
        %514 = vmatpush.msra.mxu0 0.0
        %515 = vmatpush.msra.mxu0 0.0
        %516 = vmatpush.msra.mxu0 0.0
        %517 = vmatpush.msra.mxu0 %v497
        %518 = vmatmul.f32.gmra.mxu0 %v500
        %v519 = vpop.f32.mrf.mxu0
        %v520 = vadd.f32 0.0, %v519
        %521 = vdwg.mxu0
        %522 = vrot.lane.b32.xlu0 %v415, 64
        %v523 = vpop.permute.xlu0 %522
        %v526 = vsel %vm420, %v495, 0
        %528 = vmatpush.msra.mxu0 0.0
        %529 = vmatpush.msra.mxu0 0.0
        %530 = vmatpush.msra.mxu0 0.0
        %531 = vmatpush.msra.mxu0 0.0
        %532 = vmatpush.msra.mxu0 0.0
        %533 = vmatpush.msra.mxu0 0.0
        %534 = vmatpush.msra.mxu0 0.0
        %535 = vmatpush.msra.mxu0 0.0
        %536 = vmatpush.msra.mxu0 0.0
        %537 = vmatpush.msra.mxu0 0.0
        %538 = vmatpush.msra.mxu0 0.0
        %539 = vmatpush.msra.mxu0 0.0
        %540 = vmatpush.msra.mxu0 0.0
        %541 = vmatpush.msra.mxu0 0.0
        %542 = vmatpush.msra.mxu0 0.0
        %543 = vmatpush.msra.mxu0 %v523
        %544 = vmatmul.f32.gmra.mxu0 %v526
        %v545 = vpop.f32.mrf.mxu0
        %v546 = vadd.f32 0.0, %v545
        %547 = vdwg.mxu0
        %548 = vrot.lane.b32.xlu0 %v412, 120
        %v549 = vpop.permute.xlu0 %548
        %550 = vrot.lane.b32.xlu0 %v412, 88
        %v551 = vpop.permute.xlu0 %550
        %v552 = vsel %vm420, %v549, 0
        %v554 = vsel %vm420, %v551, 0
        %556 = vmatpush.xpose.msra.mxu0 0.0
        %557 = vmatpush.xpose.msra.mxu0 0.0
        %558 = vmatpush.xpose.msra.mxu0 0.0
        %559 = vmatpush.xpose.msra.mxu0 0.0
        %560 = vmatpush.xpose.msra.mxu0 0.0
        %561 = vmatpush.xpose.msra.mxu0 0.0
        %562 = vmatpush.xpose.msra.mxu0 0.0
        %563 = vmatpush.xpose.msra.mxu0 0.0
        %564 = vmatpush.xpose.msra.mxu0 0.0
        %565 = vmatpush.xpose.msra.mxu0 0.0
        %566 = vmatpush.xpose.msra.mxu0 0.0
        %567 = vmatpush.xpose.msra.mxu0 0.0
        %568 = vmatpush.xpose.msra.mxu0 0.0
        %569 = vmatpush.xpose.msra.mxu0 0.0
        %570 = vmatpush.xpose.msra.mxu0 0.0
        %571 = vmatpush.xpose.msra.mxu0 %v554
        %572 = vmatmul.f32.gmra.mxu0 %v552
        %v573 = vpop.f32.mrf.mxu0
        %v574 = vadd.f32 0.0, %v573
        %575 = vdwg.mxu0
        %576 = vrot.lane.b32.xlu0 %v415, 120
        %v577 = vpop.permute.xlu0 %576
        %578 = vrot.lane.b32.xlu0 %v415, 88
        %v579 = vpop.permute.xlu0 %578
        %v580 = vsel %vm420, %v577, 0
        %v582 = vsel %vm420, %v579, 0
        %584 = vmatpush.xpose.msra.mxu0 0.0
        %585 = vmatpush.xpose.msra.mxu0 0.0
        %586 = vmatpush.xpose.msra.mxu0 0.0
        %587 = vmatpush.xpose.msra.mxu0 0.0
        %588 = vmatpush.xpose.msra.mxu0 0.0
        %589 = vmatpush.xpose.msra.mxu0 0.0
        %590 = vmatpush.xpose.msra.mxu0 0.0
        %591 = vmatpush.xpose.msra.mxu0 0.0
        %592 = vmatpush.xpose.msra.mxu0 0.0
        %593 = vmatpush.xpose.msra.mxu0 0.0
        %594 = vmatpush.xpose.msra.mxu0 0.0
        %595 = vmatpush.xpose.msra.mxu0 0.0
        %596 = vmatpush.xpose.msra.mxu0 0.0
        %597 = vmatpush.xpose.msra.mxu0 0.0
        %598 = vmatpush.xpose.msra.mxu0 0.0
        %599 = vmatpush.xpose.msra.mxu0 %v582
        %600 = vmatmul.f32.gmra.mxu0 %v580
        %v601 = vpop.f32.mrf.mxu0
        %v602 = vadd.f32 0.0, %v601
        %603 = vdwg.mxu0
        %v604 = vmul.f32 %v574, 0.35355338
        %v605 = vmul.f32 %v602, 0.35355338
        %v606 = vsel %vm420, %v604, -inf
        %607 = vmax.xlane.f32.xlu0 %v606
        %v608 = vpop.xlane.xlu0 %607
        %v609 = vsel %vm420, %v605, -inf
        %610 = vmax.xlane.f32.xlu0 %v609
        %v611 = vpop.xlane.xlu0 %610
        %v612 = vsub.f32 %v604, %v608
        %v613 = vsub.f32 %v605, %v611
        %v614 = vmul.f32 %v612, 1.442695
        %v615 = vpow.pop %v614
        %v616 = vmul.f32 %v613, 1.442695
        %v617 = vpow.pop %v616
        %v618 = vsel %vm420, %v615, 0.0
        %619 = vadd.xlane.f32.xlu0 %v618
        %v620 = vpop.xlane.xlu0 %619
        %v621 = vsel %vm420, %v617, 0.0
        %622 = vadd.xlane.f32.xlu0 %v621
        %v623 = vpop.xlane.xlu0 %622
        %v624 = vrcp.pop %v620
        %v625 = vrcp.pop %v623
        %v626 = vmul.f32 %v615, %v624
        %v627 = vmul.f32 %v617, %v625
        %628 = vrot.lane.b32.xlu0 %v412, 56
        %v629 = vpop.permute.xlu0 %628
        %v632 = vsel %vm420, %v626, 0
        %634 = vmatpush.msra.mxu0 0.0
        %635 = vmatpush.msra.mxu0 0.0
        %636 = vmatpush.msra.mxu0 0.0
        %637 = vmatpush.msra.mxu0 0.0
        %638 = vmatpush.msra.mxu0 0.0
        %639 = vmatpush.msra.mxu0 0.0
        %640 = vmatpush.msra.mxu0 0.0
        %641 = vmatpush.msra.mxu0 0.0
        %642 = vmatpush.msra.mxu0 0.0
        %643 = vmatpush.msra.mxu0 0.0
        %644 = vmatpush.msra.mxu0 0.0
        %645 = vmatpush.msra.mxu0 0.0
        %646 = vmatpush.msra.mxu0 0.0
        %647 = vmatpush.msra.mxu0 0.0
        %648 = vmatpush.msra.mxu0 0.0
        %649 = vmatpush.msra.mxu0 %v629
        %650 = vmatmul.f32.gmra.mxu0 %v632
        %v651 = vpop.f32.mrf.mxu0
        %v652 = vadd.f32 0.0, %v651
        %653 = vdwg.mxu0
        %654 = vrot.lane.b32.xlu0 %v415, 56
        %v655 = vpop.permute.xlu0 %654
        %v658 = vsel %vm420, %v627, 0
        %660 = vmatpush.msra.mxu0 0.0
        %661 = vmatpush.msra.mxu0 0.0
        %662 = vmatpush.msra.mxu0 0.0
        %663 = vmatpush.msra.mxu0 0.0
        %664 = vmatpush.msra.mxu0 0.0
        %665 = vmatpush.msra.mxu0 0.0
        %666 = vmatpush.msra.mxu0 0.0
        %667 = vmatpush.msra.mxu0 0.0
        %668 = vmatpush.msra.mxu0 0.0
        %669 = vmatpush.msra.mxu0 0.0
        %670 = vmatpush.msra.mxu0 0.0
        %671 = vmatpush.msra.mxu0 0.0
        %672 = vmatpush.msra.mxu0 0.0
        %673 = vmatpush.msra.mxu0 0.0
        %674 = vmatpush.msra.mxu0 0.0
        %675 = vmatpush.msra.mxu0 %v655
        %676 = vmatmul.f32.gmra.mxu0 %v658
        %v677 = vpop.f32.mrf.mxu0
        %v678 = vadd.f32 0.0, %v677
        %679 = vdwg.mxu0
        %v681 = vsel %vm420, %v652, 0
        %v684 = vsel %vm420, %v678, 0
        %686 = vmatpush.msra.mxu0 0.0
        %687 = vmatpush.msra.mxu0 0.0
        %688 = vmatpush.msra.mxu0 0.0
        %689 = vmatpush.msra.mxu0 0.0
        %690 = vmatpush.msra.mxu0 0.0
        %691 = vmatpush.msra.mxu0 0.0
        %692 = vmatpush.msra.mxu0 0.0
        %693 = vmatpush.msra.mxu0 0.0
        %694 = vmatpush.msra.mxu0 0.0
        %695 = vmatpush.msra.mxu0 0.0
        %696 = vmatpush.msra.mxu0 0.0
        %697 = vmatpush.msra.mxu0 0.0
        %698 = vmatpush.msra.mxu0 0.0
        %699 = vmatpush.msra.mxu0 0.0
        %700 = vmatpush.msra.mxu0 0.0
        %701 = vmatpush.msra.mxu0 %v370
        %702 = vmatmul.f32.gmra.mxu0 %v681
        %v703 = vpop.f32.mrf.mxu0
        %v704 = vadd.f32 0.0, %v703
        %705 = vmatmul.f32.gmra.mxu0 %v684
        %v706 = vpop.f32.mrf.mxu0
        %v707 = vadd.f32 0.0, %v706
        %708 = vdwg.mxu0
        %v710 = vsel %vm420, %v520, 0
        %v713 = vsel %vm420, %v546, 0
        %715 = vmatpush.msra.mxu0 0.0
        %716 = vmatpush.msra.mxu0 0.0
        %717 = vmatpush.msra.mxu0 0.0
        %718 = vmatpush.msra.mxu0 0.0
        %719 = vmatpush.msra.mxu0 0.0
        %720 = vmatpush.msra.mxu0 0.0
        %721 = vmatpush.msra.mxu0 0.0
        %722 = vmatpush.msra.mxu0 0.0
        %723 = vmatpush.msra.mxu0 0.0
        %724 = vmatpush.msra.mxu0 0.0
        %725 = vmatpush.msra.mxu0 0.0
        %726 = vmatpush.msra.mxu0 0.0
        %727 = vmatpush.msra.mxu0 0.0
        %728 = vmatpush.msra.mxu0 0.0
        %729 = vmatpush.msra.mxu0 0.0
        %730 = vmatpush.msra.mxu0 %v369
        %731 = vmatmul.f32.gmra.mxu0 %v710
        %v732 = vpop.f32.mrf.mxu0
        %v733 = vadd.f32 %v704, %v732
        %734 = vmatmul.f32.gmra.mxu0 %v713
        %v735 = vpop.f32.mrf.mxu0
        %v736 = vadd.f32 %v707, %v735
        %737 = vdwg.mxu0
        %738 = vrot.lane.b32.xlu0 %v412, 112
        %v739 = vpop.permute.xlu0 %738
        %740 = vrot.lane.b32.xlu0 %v412, 80
        %v741 = vpop.permute.xlu0 %740
        %v742 = vsel %vm420, %v739, 0
        %v744 = vsel %vm420, %v741, 0
        %746 = vmatpush.xpose.msra.mxu0 0.0
        %747 = vmatpush.xpose.msra.mxu0 0.0
        %748 = vmatpush.xpose.msra.mxu0 0.0
        %749 = vmatpush.xpose.msra.mxu0 0.0
        %750 = vmatpush.xpose.msra.mxu0 0.0
        %751 = vmatpush.xpose.msra.mxu0 0.0
        %752 = vmatpush.xpose.msra.mxu0 0.0
        %753 = vmatpush.xpose.msra.mxu0 0.0
        %754 = vmatpush.xpose.msra.mxu0 0.0
        %755 = vmatpush.xpose.msra.mxu0 0.0
        %756 = vmatpush.xpose.msra.mxu0 0.0
        %757 = vmatpush.xpose.msra.mxu0 0.0
        %758 = vmatpush.xpose.msra.mxu0 0.0
        %759 = vmatpush.xpose.msra.mxu0 0.0
        %760 = vmatpush.xpose.msra.mxu0 0.0
        %761 = vmatpush.xpose.msra.mxu0 %v744
        %762 = vmatmul.f32.gmra.mxu0 %v742
        %v763 = vpop.f32.mrf.mxu0
        %v764 = vadd.f32 0.0, %v763
        %765 = vdwg.mxu0
        %766 = vrot.lane.b32.xlu0 %v415, 112
        %v767 = vpop.permute.xlu0 %766
        %768 = vrot.lane.b32.xlu0 %v415, 80
        %v769 = vpop.permute.xlu0 %768
        %v770 = vsel %vm420, %v767, 0
        %v772 = vsel %vm420, %v769, 0
        %774 = vmatpush.xpose.msra.mxu0 0.0
        %775 = vmatpush.xpose.msra.mxu0 0.0
        %776 = vmatpush.xpose.msra.mxu0 0.0
        %777 = vmatpush.xpose.msra.mxu0 0.0
        %778 = vmatpush.xpose.msra.mxu0 0.0
        %779 = vmatpush.xpose.msra.mxu0 0.0
        %780 = vmatpush.xpose.msra.mxu0 0.0
        %781 = vmatpush.xpose.msra.mxu0 0.0
        %782 = vmatpush.xpose.msra.mxu0 0.0
        %783 = vmatpush.xpose.msra.mxu0 0.0
        %784 = vmatpush.xpose.msra.mxu0 0.0
        %785 = vmatpush.xpose.msra.mxu0 0.0
        %786 = vmatpush.xpose.msra.mxu0 0.0
        %787 = vmatpush.xpose.msra.mxu0 0.0
        %788 = vmatpush.xpose.msra.mxu0 0.0
        %789 = vmatpush.xpose.msra.mxu0 %v772
        %790 = vmatmul.f32.gmra.mxu0 %v770
        %v791 = vpop.f32.mrf.mxu0
        %v792 = vadd.f32 0.0, %v791
        %793 = vdwg.mxu0
        %v794 = vmul.f32 %v764, 0.35355338
        %v795 = vmul.f32 %v792, 0.35355338
        %v796 = vsel %vm420, %v794, -inf
        %797 = vmax.xlane.f32.xlu0 %v796
        %v798 = vpop.xlane.xlu0 %797
        %v799 = vsel %vm420, %v795, -inf
        %800 = vmax.xlane.f32.xlu0 %v799
        %v801 = vpop.xlane.xlu0 %800
        %v802 = vsub.f32 %v794, %v798
        %v803 = vsub.f32 %v795, %v801
        %v804 = vmul.f32 %v802, 1.442695
        %v805 = vpow.pop %v804
        %v806 = vmul.f32 %v803, 1.442695
        %v807 = vpow.pop %v806
        %v808 = vsel %vm420, %v805, 0.0
        %809 = vadd.xlane.f32.xlu0 %v808
        %v810 = vpop.xlane.xlu0 %809
        %v811 = vsel %vm420, %v807, 0.0
        %812 = vadd.xlane.f32.xlu0 %v811
        %v813 = vpop.xlane.xlu0 %812
        %v814 = vrcp.pop %v810
        %v815 = vrcp.pop %v813
        %v816 = vmul.f32 %v805, %v814
        %v817 = vmul.f32 %v807, %v815
        %818 = vrot.lane.b32.xlu0 %v412, 48
        %v819 = vpop.permute.xlu0 %818
        %v822 = vsel %vm420, %v816, 0
        %824 = vmatpush.msra.mxu0 0.0
        %825 = vmatpush.msra.mxu0 0.0
        %826 = vmatpush.msra.mxu0 0.0
        %827 = vmatpush.msra.mxu0 0.0
        %828 = vmatpush.msra.mxu0 0.0
        %829 = vmatpush.msra.mxu0 0.0
        %830 = vmatpush.msra.mxu0 0.0
        %831 = vmatpush.msra.mxu0 0.0
        %832 = vmatpush.msra.mxu0 0.0
        %833 = vmatpush.msra.mxu0 0.0
        %834 = vmatpush.msra.mxu0 0.0
        %835 = vmatpush.msra.mxu0 0.0
        %836 = vmatpush.msra.mxu0 0.0
        %837 = vmatpush.msra.mxu0 0.0
        %838 = vmatpush.msra.mxu0 0.0
        %839 = vmatpush.msra.mxu0 %v819
        %840 = vmatmul.f32.gmra.mxu0 %v822
        %v841 = vpop.f32.mrf.mxu0
        %v842 = vadd.f32 0.0, %v841
        %843 = vdwg.mxu0
        %844 = vrot.lane.b32.xlu0 %v415, 48
        %v845 = vpop.permute.xlu0 %844
        %v848 = vsel %vm420, %v817, 0
        %850 = vmatpush.msra.mxu0 0.0
        %851 = vmatpush.msra.mxu0 0.0
        %852 = vmatpush.msra.mxu0 0.0
        %853 = vmatpush.msra.mxu0 0.0
        %854 = vmatpush.msra.mxu0 0.0
        %855 = vmatpush.msra.mxu0 0.0
        %856 = vmatpush.msra.mxu0 0.0
        %857 = vmatpush.msra.mxu0 0.0
        %858 = vmatpush.msra.mxu0 0.0
        %859 = vmatpush.msra.mxu0 0.0
        %860 = vmatpush.msra.mxu0 0.0
        %861 = vmatpush.msra.mxu0 0.0
        %862 = vmatpush.msra.mxu0 0.0
        %863 = vmatpush.msra.mxu0 0.0
        %864 = vmatpush.msra.mxu0 0.0
        %865 = vmatpush.msra.mxu0 %v845
        %866 = vmatmul.f32.gmra.mxu0 %v848
        %v867 = vpop.f32.mrf.mxu0
        %v868 = vadd.f32 0.0, %v867
        %869 = vdwg.mxu0
        %v871 = vsel %vm420, %v842, 0
        %v874 = vsel %vm420, %v868, 0
        %876 = vmatpush.msra.mxu0 0.0
        %877 = vmatpush.msra.mxu0 0.0
        %878 = vmatpush.msra.mxu0 0.0
        %879 = vmatpush.msra.mxu0 0.0
        %880 = vmatpush.msra.mxu0 0.0
        %881 = vmatpush.msra.mxu0 0.0
        %882 = vmatpush.msra.mxu0 0.0
        %883 = vmatpush.msra.mxu0 0.0
        %884 = vmatpush.msra.mxu0 0.0
        %885 = vmatpush.msra.mxu0 0.0
        %886 = vmatpush.msra.mxu0 0.0
        %887 = vmatpush.msra.mxu0 0.0
        %888 = vmatpush.msra.mxu0 0.0
        %889 = vmatpush.msra.mxu0 0.0
        %890 = vmatpush.msra.mxu0 0.0
        %891 = vmatpush.msra.mxu0 %v371
        %892 = vmatmul.f32.gmra.mxu0 %v871
        %v893 = vpop.f32.mrf.mxu0
        %v894 = vadd.f32 0.0, %v893
        %895 = vmatmul.f32.gmra.mxu0 %v874
        %v896 = vpop.f32.mrf.mxu0
        %v897 = vadd.f32 0.0, %v896
        %898 = vdwg.mxu0
        %v899 = vadd.f32 %v733, %v894
        %v900 = vadd.f32 %v736, %v897
        %901 = vrot.lane.b32.xlu0 %v412, 104
        %v902 = vpop.permute.xlu0 %901
        %903 = vrot.lane.b32.xlu0 %v412, 72
        %v904 = vpop.permute.xlu0 %903
        %v905 = vsel %vm420, %v902, 0
        %v907 = vsel %vm420, %v904, 0
        %909 = vmatpush.xpose.msra.mxu0 0.0
        %910 = vmatpush.xpose.msra.mxu0 0.0
        %911 = vmatpush.xpose.msra.mxu0 0.0
        %912 = vmatpush.xpose.msra.mxu0 0.0
        %913 = vmatpush.xpose.msra.mxu0 0.0
        %914 = vmatpush.xpose.msra.mxu0 0.0
        %915 = vmatpush.xpose.msra.mxu0 0.0
        %916 = vmatpush.xpose.msra.mxu0 0.0
        %917 = vmatpush.xpose.msra.mxu0 0.0
        %918 = vmatpush.xpose.msra.mxu0 0.0
        %919 = vmatpush.xpose.msra.mxu0 0.0
        %920 = vmatpush.xpose.msra.mxu0 0.0
        %921 = vmatpush.xpose.msra.mxu0 0.0
        %922 = vmatpush.xpose.msra.mxu0 0.0
        %923 = vmatpush.xpose.msra.mxu0 0.0
        %924 = vmatpush.xpose.msra.mxu0 %v907
        %925 = vmatmul.f32.gmra.mxu0 %v905
        %v926 = vpop.f32.mrf.mxu0
        %v927 = vadd.f32 0.0, %v926
        %928 = vdwg.mxu0
        %929 = vrot.lane.b32.xlu0 %v415, 104
        %v930 = vpop.permute.xlu0 %929
        %931 = vrot.lane.b32.xlu0 %v415, 72
        %v932 = vpop.permute.xlu0 %931
        %v933 = vsel %vm420, %v930, 0
        %v935 = vsel %vm420, %v932, 0
        %937 = vmatpush.xpose.msra.mxu0 0.0
        %938 = vmatpush.xpose.msra.mxu0 0.0
        %939 = vmatpush.xpose.msra.mxu0 0.0
        %940 = vmatpush.xpose.msra.mxu0 0.0
        %941 = vmatpush.xpose.msra.mxu0 0.0
        %942 = vmatpush.xpose.msra.mxu0 0.0
        %943 = vmatpush.xpose.msra.mxu0 0.0
        %944 = vmatpush.xpose.msra.mxu0 0.0
        %945 = vmatpush.xpose.msra.mxu0 0.0
        %946 = vmatpush.xpose.msra.mxu0 0.0
        %947 = vmatpush.xpose.msra.mxu0 0.0
        %948 = vmatpush.xpose.msra.mxu0 0.0
        %949 = vmatpush.xpose.msra.mxu0 0.0
        %950 = vmatpush.xpose.msra.mxu0 0.0
        %951 = vmatpush.xpose.msra.mxu0 0.0
        %952 = vmatpush.xpose.msra.mxu0 %v935
        %953 = vmatmul.f32.gmra.mxu0 %v933
        %v954 = vpop.f32.mrf.mxu0
        %v955 = vadd.f32 0.0, %v954
        %956 = vdwg.mxu0
        %v957 = vmul.f32 %v927, 0.35355338
        %v958 = vmul.f32 %v955, 0.35355338
        %v959 = vsel %vm420, %v957, -inf
        %960 = vmax.xlane.f32.xlu0 %v959
        %v961 = vpop.xlane.xlu0 %960
        %v962 = vsel %vm420, %v958, -inf
        %963 = vmax.xlane.f32.xlu0 %v962
        %v964 = vpop.xlane.xlu0 %963
        %v965 = vsub.f32 %v957, %v961
        %v966 = vsub.f32 %v958, %v964
        %v967 = vmul.f32 %v965, 1.442695
        %v968 = vpow.pop %v967
        %v969 = vmul.f32 %v966, 1.442695
        %v970 = vpow.pop %v969
        %v971 = vsel %vm420, %v968, 0.0
        %972 = vadd.xlane.f32.xlu0 %v971
        %v973 = vpop.xlane.xlu0 %972
        %v974 = vsel %vm420, %v970, 0.0
        %975 = vadd.xlane.f32.xlu0 %v974
        %v976 = vpop.xlane.xlu0 %975
        %v977 = vrcp.pop %v973
        %v978 = vrcp.pop %v976
        %v979 = vmul.f32 %v968, %v977
        %v980 = vmul.f32 %v970, %v978
        %981 = vrot.lane.b32.xlu0 %v412, 40
        %v982 = vpop.permute.xlu0 %981
        %v985 = vsel %vm420, %v979, 0
        %987 = vmatpush.msra.mxu0 0.0
        %988 = vmatpush.msra.mxu0 0.0
        %989 = vmatpush.msra.mxu0 0.0
        %990 = vmatpush.msra.mxu0 0.0
        %991 = vmatpush.msra.mxu0 0.0
        %992 = vmatpush.msra.mxu0 0.0
        %993 = vmatpush.msra.mxu0 0.0
        %994 = vmatpush.msra.mxu0 0.0
        %995 = vmatpush.msra.mxu0 0.0
        %996 = vmatpush.msra.mxu0 0.0
        %997 = vmatpush.msra.mxu0 0.0
        %998 = vmatpush.msra.mxu0 0.0
        %999 = vmatpush.msra.mxu0 0.0
        %1000 = vmatpush.msra.mxu0 0.0
        %1001 = vmatpush.msra.mxu0 0.0
        %1002 = vmatpush.msra.mxu0 %v982
        %1003 = vmatmul.f32.gmra.mxu0 %v985
        %v1004 = vpop.f32.mrf.mxu0
        %v1005 = vadd.f32 0.0, %v1004
        %1006 = vdwg.mxu0
        %1007 = vrot.lane.b32.xlu0 %v415, 40
        %v1008 = vpop.permute.xlu0 %1007
        %v1011 = vsel %vm420, %v980, 0
        %1013 = vmatpush.msra.mxu0 0.0
        %1014 = vmatpush.msra.mxu0 0.0
        %1015 = vmatpush.msra.mxu0 0.0
        %1016 = vmatpush.msra.mxu0 0.0
        %1017 = vmatpush.msra.mxu0 0.0
        %1018 = vmatpush.msra.mxu0 0.0
        %1019 = vmatpush.msra.mxu0 0.0
        %1020 = vmatpush.msra.mxu0 0.0
        %1021 = vmatpush.msra.mxu0 0.0
        %1022 = vmatpush.msra.mxu0 0.0
        %1023 = vmatpush.msra.mxu0 0.0
        %1024 = vmatpush.msra.mxu0 0.0
        %1025 = vmatpush.msra.mxu0 0.0
        %1026 = vmatpush.msra.mxu0 0.0
        %1027 = vmatpush.msra.mxu0 0.0
        %1028 = vmatpush.msra.mxu0 %v1008
        %1029 = vmatmul.f32.gmra.mxu0 %v1011
        %v1030 = vpop.f32.mrf.mxu0
        %v1031 = vadd.f32 0.0, %v1030
        %1032 = vdwg.mxu0
        %v1034 = vsel %vm420, %v1005, 0
        %v1037 = vsel %vm420, %v1031, 0
        %1039 = vmatpush.msra.mxu0 0.0
        %1040 = vmatpush.msra.mxu0 0.0
        %1041 = vmatpush.msra.mxu0 0.0
        %1042 = vmatpush.msra.mxu0 0.0
        %1043 = vmatpush.msra.mxu0 0.0
        %1044 = vmatpush.msra.mxu0 0.0
        %1045 = vmatpush.msra.mxu0 0.0
        %1046 = vmatpush.msra.mxu0 0.0
        %1047 = vmatpush.msra.mxu0 0.0
        %1048 = vmatpush.msra.mxu0 0.0
        %1049 = vmatpush.msra.mxu0 0.0
        %1050 = vmatpush.msra.mxu0 0.0
        %1051 = vmatpush.msra.mxu0 0.0
        %1052 = vmatpush.msra.mxu0 0.0
        %1053 = vmatpush.msra.mxu0 0.0
        %1054 = vmatpush.msra.mxu0 %v372
        %1055 = vmatmul.f32.gmra.mxu0 %v1034
        %v1056 = vpop.f32.mrf.mxu0
        %v1057 = vadd.f32 0.0, %v1056
        %1058 = vmatmul.f32.gmra.mxu0 %v1037
        %v1059 = vpop.f32.mrf.mxu0
        %v1060 = vadd.f32 0.0, %v1059
        %1061 = vdwg.mxu0
        %v1062 = vadd.f32 %v899, %v1057
        %v1063 = vadd.f32 %v900, %v1060
        %v1064 = vperm.slane %v385, 1
        %v1065 = vadd.f32 %v1062, %v1064
        %v1066 = vadd.f32 %v1063, %v1064
        %v1067 = vadd.f32 %v363, %v1065
        %v1068 = vadd.f32 %v364, %v1066
        %v1069 = vsel %vm387, %v1067, 0.0
        %1070 = vadd.xlane.f32.xlu0 %v1069
        %v1071 = vpop.xlane.xlu0 %1070
        %v1072 = vsel %vm387, %v1068, 0.0
        %1073 = vadd.xlane.f32.xlu0 %v1072
        %v1074 = vpop.xlane.xlu0 %1073
        %v1075 = vrcp.pop 32.0
        %v1076 = vmul.f32 32.0, %v1075
        %v1077 = vsub.f32 1.0, %v1076
        %v1078 = vmul.f32 %v1075, %v1077
        %v1079 = vadd.f32 %v1075, %v1078
        %vm1080 = vweird.f32 %v1075
        %v1081 = vsel %vm1080, %v1075, %v1079
        %v1082 = vmul.f32 %v1071, %v1081
        %v1083 = vmul.f32 %v1074, %v1081
        %v1084 = vsub.f32 %v1067, %v1082
        %v1085 = vsub.f32 %v1068, %v1083
        %v1086 = vmul.f32 %v1084, %v1084
        %v1087 = vmul.f32 %v1085, %v1085
        %v1088 = vsel %vm387, %v1086, 0.0
        %1089 = vadd.xlane.f32.xlu0 %v1088
        %v1090 = vpop.xlane.xlu0 %1089
        %v1091 = vsel %vm387, %v1087, 0.0
        %1092 = vadd.xlane.f32.xlu0 %v1091
        %v1093 = vpop.xlane.xlu0 %1092
        %v1094 = vmul.f32 %v1090, %v1081
        %v1095 = vmul.f32 %v1093, %v1081
        %v1096 = vadd.f32 %v1094, 1e-05
        %v1097 = vadd.f32 %v1095, 1e-05
        %v1098 = vrsqrt.pop %v1096
        %v1099 = vmul.f32 %v1098, %v1096
        %v1100 = vmul.f32 %v1099, %v1098
        %v1101 = vmul.f32 0.5, %v1100
        %v1102 = vsub.f32 1.5, %v1101
        %v1103 = vmul.f32 %v1098, %v1102
        %vm1104 = vweird.f32 %v1096
        %vm1105 = vweird.f32 %v1098
        %vm1106 = vmor %vm1104, %vm1105
        %v1107 = vsel %vm1106, %v1098, %v1103
        %v1108 = vrsqrt.pop %v1097
        %v1109 = vmul.f32 %v1108, %v1097
        %v1110 = vmul.f32 %v1109, %v1108
        %v1111 = vmul.f32 0.5, %v1110
        %v1112 = vsub.f32 1.5, %v1111
        %v1113 = vmul.f32 %v1108, %v1112
        %vm1114 = vweird.f32 %v1097
        %vm1115 = vweird.f32 %v1108
        %vm1116 = vmor %vm1114, %vm1115
        %v1117 = vsel %vm1116, %v1108, %v1113
        %v1118 = vmul.f32 %v1084, %v1107
        %v1119 = vmul.f32 %v1085, %v1117
        %v1120 = vperm.slane %v385, 2
        %v1121 = vmul.f32 %v1118, %v1120
        %v1122 = vmul.f32 %v1119, %v1120
        %v1123 = vperm.slane %v385, 3
        %v1124 = vadd.f32 %v1121, %v1123
        %v1125 = vadd.f32 %v1122, %v1123
        %v1126 = vperm.slane %v385, 4
        %v1128 = vsel %vm387, %v1124, 0
        %v1131 = vsel %vm387, %v1125, 0
        %1133 = vmatpush.msra.mxu0 0.0
        %1134 = vmatpush.msra.mxu0 0.0
        %1135 = vmatpush.msra.mxu0 0.0
        %1136 = vmatpush.msra.mxu0 0.0
        %1137 = vmatpush.msra.mxu0 0.0
        %1138 = vmatpush.msra.mxu0 0.0
        %1139 = vmatpush.msra.mxu0 0.0
        %1140 = vmatpush.msra.mxu0 0.0
        %1141 = vmatpush.msra.mxu0 0.0
        %1142 = vmatpush.msra.mxu0 0.0
        %1143 = vmatpush.msra.mxu0 0.0
        %1144 = vmatpush.msra.mxu0 0.0
        %1145 = vmatpush.msra.mxu0 %v376
        %1146 = vmatpush.msra.mxu0 %v375
        %1147 = vmatpush.msra.mxu0 %v374
        %1148 = vmatpush.msra.mxu0 %v373
        %1149 = vmatmul.f32.gmra.mxu0 %v1128
        %v1150 = vpop.f32.mrf.mxu0
        %v1151 = vadd.f32 %v1126, %v1150
        %1152 = vmatmul.f32.gmra.mxu0 %v1131
        %v1153 = vpop.f32.mrf.mxu0
        %v1154 = vadd.f32 %v1126, %v1153
        %1155 = vdwg.mxu0
        %v1156 = vmax.f32 %v1151, 0.0
        %v1157 = vmax.f32 %v1154, 0.0
        %v1158 = vperm.slane %v385, 5
        %vm1159 = vcmask 523264
        %v1161 = vsel %vm1159, %v1156, 0
        %v1164 = vsel %vm1159, %v1157, 0
        %1166 = vmatpush.msra.mxu0 0.0
        %1167 = vmatpush.msra.mxu0 0.0
        %1168 = vmatpush.msra.mxu0 0.0
        %1169 = vmatpush.msra.mxu0 0.0
        %1170 = vmatpush.msra.mxu0 0.0
        %1171 = vmatpush.msra.mxu0 0.0
        %1172 = vmatpush.msra.mxu0 0.0
        %1173 = vmatpush.msra.mxu0 0.0
        %1174 = vmatpush.msra.mxu0 %v384
        %1175 = vmatpush.msra.mxu0 %v383
        %1176 = vmatpush.msra.mxu0 %v382
        %1177 = vmatpush.msra.mxu0 %v381
        %1178 = vmatpush.msra.mxu0 %v380
        %1179 = vmatpush.msra.mxu0 %v379
        %1180 = vmatpush.msra.mxu0 %v378
        %1181 = vmatpush.msra.mxu0 %v377
        %1182 = vmatmul.f32.gmra.mxu0 %v1161
        %v1183 = vpop.f32.mrf.mxu0
        %v1184 = vadd.f32 %v1158, %v1183
        %1185 = vmatmul.f32.gmra.mxu0 %v1164
        %v1186 = vpop.f32.mrf.mxu0
        %v1187 = vadd.f32 %v1158, %v1186
        %1188 = vdwg.mxu0
        %v1189 = vadd.f32 %v1124, %v1184
        %v1190 = vadd.f32 %v1125, %v1187
        %v1191 = vsel %vm387, %v1189, 0.0
        %1192 = vadd.xlane.f32.xlu0 %v1191
        %v1193 = vpop.xlane.xlu0 %1192
        %v1194 = vsel %vm387, %v1190, 0.0
        %1195 = vadd.xlane.f32.xlu0 %v1194
        %v1196 = vpop.xlane.xlu0 %1195
        %v1197 = vmul.f32 %v1193, %v1081
        %v1198 = vmul.f32 %v1196, %v1081
        %v1199 = vsub.f32 %v1189, %v1197
        %v1200 = vsub.f32 %v1190, %v1198
        %v1201 = vmul.f32 %v1199, %v1199
        %v1202 = vmul.f32 %v1200, %v1200
        %v1203 = vsel %vm387, %v1201, 0.0
        %1204 = vadd.xlane.f32.xlu0 %v1203
        %v1205 = vpop.xlane.xlu0 %1204
        %v1206 = vsel %vm387, %v1202, 0.0
        %1207 = vadd.xlane.f32.xlu0 %v1206
        %v1208 = vpop.xlane.xlu0 %1207
        %v1209 = vmul.f32 %v1205, %v1081
        %v1210 = vmul.f32 %v1208, %v1081
        %v1211 = vadd.f32 %v1209, 1e-05
        %v1212 = vadd.f32 %v1210, 1e-05
        %v1213 = vrsqrt.pop %v1211
        %v1214 = vmul.f32 %v1213, %v1211
        %v1215 = vmul.f32 %v1214, %v1213
        %v1216 = vmul.f32 0.5, %v1215
        %v1217 = vsub.f32 1.5, %v1216
        %v1218 = vmul.f32 %v1213, %v1217
        %vm1219 = vweird.f32 %v1211
        %vm1220 = vweird.f32 %v1213
        %vm1221 = vmor %vm1219, %vm1220
        %v1222 = vsel %vm1221, %v1213, %v1218
        %v1223 = vrsqrt.pop %v1212
        %v1224 = vmul.f32 %v1223, %v1212
        %v1225 = vmul.f32 %v1224, %v1223
        %v1226 = vmul.f32 0.5, %v1225
        %v1227 = vsub.f32 1.5, %v1226
        %v1228 = vmul.f32 %v1223, %v1227
        %vm1229 = vweird.f32 %v1212
        %vm1230 = vweird.f32 %v1223
        %vm1231 = vmor %vm1229, %vm1230
        %v1232 = vsel %vm1231, %v1223, %v1228
        %v1233 = vmul.f32 %v1199, %v1222
        %v1234 = vmul.f32 %v1200, %v1232
        %v1235 = vperm.slane %v385, 6
        %v1236 = vmul.f32 %v1233, %v1235
        %v1237 = vmul.f32 %v1234, %v1235
        %v1238 = vperm.slane %v385, 7
        %v1239 = vadd.f32 %v1236, %v1238
        %v1240 = vadd.f32 %v1237, %v1238
        %1241 = vst.msk [vmem:[#allocation2] sm:$0xff] %vm387, %v1239
        %1242 = vst.msk [vmem:[#allocation2 + $0x8] sm:$0xff] %vm387, %v1240
        %p1243 = scmp.eq.s32.totalorder %s22, 1
        // Predicated region
        $region57: #{tpu_custom_call.1} parent=43 // pred_check
          %p1244 = pneg %p1243
        $region58: #{tpu_custom_call.1} parent=43 // pred_check_branch
          %1246 = sbr.rel (%p1244) target = $region60
        $region59: #{tpu_custom_call.1} parent=43 // pred_region
          %1247 = vst.msk [vmem:[#allocation8] sm:$0xff] %vm387, %v1239
          %1248 = vst.msk [vmem:[#allocation8 + $0x8] sm:$0xff] %vm387, %v1240
        $region60: #{tpu_custom_call.1} parent=43 // pred_fallthru
          _
        // Predicated region
        $region61: #{tpu_custom_call.1} parent=43 // pred_check
          %p1249 = pneg %p186
        $region62: #{tpu_custom_call.1} parent=43 // pred_check_branch
          %1251 = sbr.rel (%p1249) target = $region64
        $region63: #{tpu_custom_call.1} parent=43 // pred_region
          %1253 = vsyncadd [#allocation5], 0
          %s1254 = sshll.u32 [#allocation8], 4
          %s1255 = int_to_ptr.vmem [resolvable:$true] %s1254
          %s1256 = sshll.u32 %s6, 4
          %s1257 = int_to_ptr.hbm [resolvable:$true] %s1256
          %1262 = dma.vmem_to_hbm [thread:$0]  %s1255, 256, %s1257, [#allocation5], 128, 128, 8
        $region64: #{tpu_custom_call.1} parent=43 // pred_fallthru
          _
        // Predicated region
        $region65: #{tpu_custom_call.1} parent=43 // pred_check
          %p1263 = pneg %p186
        $region66: #{tpu_custom_call.1} parent=43 // pred_check_branch
          %1265 = sbr.rel (%p1263) target = $region68
        $region67: #{tpu_custom_call.1} parent=43 // pred_region
          %1267 = dma.done [#allocation5], 256
        $region68: #{tpu_custom_call.1} parent=43 // pred_fallthru
          _
      $region44: #{tpu_custom_call.1} parent=5 // pred_fallthru
        _
      %p1268 = scmp.le.s32.totalorder 2, %s17
      // Predicated region
      $region69: #{tpu_custom_call.1} parent=5 // pred_check
        %p1269 = pneg %p1268
      $region70: #{tpu_custom_call.1} parent=5 // pred_check_branch
        %1271 = sbr.rel (%p1269) target = $region72
      $region71: #{tpu_custom_call.1} parent=5 // pred_region
        %s1272 = ssub.s32 %s17, 2
      $region72: #{tpu_custom_call.1} parent=5 // pred_fallthru
        _
    $region6: #{tpu_custom_call.1} parent=1 // loop_footer
      %s21 = sadd.s32 1, %s17
    $region7: #{tpu_custom_call.1} parent=1 // loop_footer_branch
      %16 = sbr.rel target = $region3
    $region8: #{tpu_custom_call.1} parent=1 // loop_exit
      _
    %1273 = vsyncpa [#allocation4], 1
    %s1274 = scalar_lea.sflag [#allocation4], 1
    %1275 = vsyncpa %s1274, 1
    %1276 = vsyncpa [#allocation7], 1
    %s1277 = scalar_lea.sflag [#allocation7], 1
    %1278 = vsyncpa %s1277, 1
    %1279 = vsyncpa [#allocation5], 1
    %s1280 = scalar_lea.sflag [#allocation5], 1
    %1281 = vsyncpa %s1280, 1

</llo_original>
